<compile_context>
chip_gen: v6e
topology: v6e:2x2x1
jax: 0.10.0
libtpu: 0.0.40
codegen_flags: <defaults>
</compile_context>

<pallas_src>
import jax
import jax.numpy as jnp
from jax.experimental import pallas as pl
from jax.experimental.pallas import tpu as pltpu

EPS = 1e-5                      # nn.BatchNorm2d default eps
LANE = 128                      # TPU lane width: C_out is padded to a multiple of this
COMPUTE_DTYPE = jnp.float32     # set to jnp.bfloat16 on v6e/v7x for 2x MXU throughput
                                # (BN statistics / normalization always stay in f32)
VMEM_LIMIT = 32 * 1024 * 1024   # explicit scoped-VMEM cap, safe on v5e/v6e/v7x


def conv_stats_kernel(x0_ref, x1_ref, x2_ref, w_ref, y_ref, stats_ref):
    """One output row of the 3x3 conv + per-row BN partial sums.

    x{0,1,2}_ref : (W+2, C_in)        padded input rows h, h+1, h+2
    w_ref        : (3, 3, C_in, C_out_pad)
    y_ref        : (W, C_out_pad)     conv output (f32, lane-dense)
    stats_ref    : (2, C_out_pad)     [sum(y), sum(y*y)] over this row's W pixels
    """
    w_out = y_ref.shape[0]
    coutp = y_ref.shape[1]
    rows = (x0_ref[...], x1_ref[...], x2_ref[...])

    acc = jnp.zeros((w_out, coutp), jnp.float32)
    for ky in range(3):
        for kx in range(3):
            xs = rows[ky][kx:kx + w_out, :]                 # (W, C_in) shifted view
            acc = acc + jnp.dot(xs, w_ref[ky, kx],
                                preferred_element_type=jnp.float32)

    y_ref[...] = acc
    s = jnp.sum(acc, axis=0, keepdims=True)                 # (1, C_out_pad)
    sq = jnp.sum(acc * acc, axis=0, keepdims=True)          # (1, C_out_pad)
    stats_ref[...] = jnp.concatenate([s, sq], axis=0)


def bn_relu_kernel(y_ref, scale_ref, shift_ref, o_ref):
    """Per-channel affine (pre-hoisted scale/shift) + ReLU on an M-tile."""
    o_ref[...] = jnp.maximum(
        y_ref[...] * scale_ref[...] + shift_ref[...], 0.0).astype(o_ref.dtype)


def _pick_row_tile(m, cap=2048):
    """Largest multiple-of-8 divisor of m not exceeding cap (else m itself)."""
    best = None
    t = 8
    while t <= min(m, cap):
        if m % t == 0:
            best = t
        t += 8
    return best if best is not None else m


def conv_batch_norm(x_nchw, weight, bias, gamma, beta, *, padding=1):
    """x_nchw: [N, C_in, H, W]; weight: [C_out, C_in, 3, 3] (PyTorch OIHW)."""
    N, C_in, H, W = x_nchw.shape
    C_out, _, KH, KW = weight.shape
    assert KH == 3 and KW == 3 and padding == 1, "kernel specialized to 3x3, pad=1"

    coutp = ((C_out + LANE - 1) // LANE) * LANE
    wp = W + 2 * padding

    # NCHW -> NHWC + spatial zero-pad (single copy; no 9x im2col expansion).
    x_nhwc = jnp.transpose(x_nchw, (0, 2, 3, 1)).astype(COMPUTE_DTYPE)
    x_pad = jnp.pad(x_nhwc, ((0, 0), (padding, padding), (padding, padding), (0, 0)))

    # OIHW -> [3, 3, C_in, C_out_pad], lane-dense / 128-padded along C_out.
    w_khwc = jnp.transpose(weight, (2, 3, 1, 0)).astype(COMPUTE_DTYPE)
    w_pad = jnp.pad(w_khwc, ((0, 0), (0, 0), (0, 0), (0, coutp - C_out)))

    # Conv bias is intentionally unused: it is exactly cancelled by the
    # training-mode BatchNorm mean subtraction (removing it saves a VPU add
    # over the full output plus one input DMA).
    del bias

    def row_spec(ky):
        return pl.BlockSpec((None, None, wp, C_in),
                            lambda n, h, ky=ky: (n, h + ky, 0, 0))

    # ---- Pass 1: conv + per-row BN partial sums ----------------------------
    y, stats = pl.pallas_call(
        conv_stats_kernel,
        out_shape=(
            jax.ShapeDtypeStruct((N, H, W, coutp), jnp.float32),
            jax.ShapeDtypeStruct((N, H, 2, coutp), jnp.float32),
        ),
        grid=(N, H),
        in_specs=[
            row_spec(0), row_spec(1), row_spec(2),
            pl.BlockSpec((KH, KW, C_in, coutp), lambda n, h: (0, 0, 0, 0)),
        ],
        out_specs=(
            pl.BlockSpec((None, None, W, coutp), lambda n, h: (n, h, 0, 0)),
            pl.BlockSpec((None, None, 2, coutp), lambda n, h: (n, h, 0, 0)),
        ),
        compiler_params=pltpu.CompilerParams(
            dimension_semantics=("parallel", "parallel"),
            vmem_limit_bytes=VMEM_LIMIT),
    )(x_pad, x_pad, x_pad, w_pad)

    # ---- Reduce stats, hoist per-channel scale/shift (tiny, plain JAX) -----
    m_total = N * H * W
    s_tot = jnp.sum(stats[:, :, 0, :], axis=(0, 1))          # (C_out_pad,)
    sq_tot = jnp.sum(stats[:, :, 1, :], axis=(0, 1))
    mean = s_tot / m_total
    var = jnp.maximum(sq_tot / m_total - mean * mean, 0.0)    # biased (training) var
    inv = jax.lax.rsqrt(var + EPS)
    gamma_p = jnp.pad(gamma.astype(jnp.float32), (0, coutp - C_out))
    beta_p = jnp.pad(beta.astype(jnp.float32), (0, coutp - C_out))
    scale = (gamma_p * inv).reshape(1, coutp)
    shift = (beta_p - mean * gamma_p * inv).reshape(1, coutp)

    # ---- Pass 2: y*scale + shift, ReLU (in place via input/output alias) ---
    y_flat = y.reshape(m_total, coutp)
    tm = _pick_row_tile(m_total)
    out_flat = pl.pallas_call(
        bn_relu_kernel,
        out_shape=jax.ShapeDtypeStruct((m_total, coutp), jnp.float32),
        grid=(m_total // tm,),
        in_specs=[
            pl.BlockSpec((tm, coutp), lambda i: (i, 0)),
            pl.BlockSpec((1, coutp), lambda i: (0, 0)),
            pl.BlockSpec((1, coutp), lambda i: (0, 0)),
        ],
        out_specs=pl.BlockSpec((tm, coutp), lambda i: (i, 0)),
        input_output_aliases={0: 0},
        compiler_params=pltpu.CompilerParams(
            dimension_semantics=("parallel",),
            vmem_limit_bytes=VMEM_LIMIT),
    )(y_flat, scale, shift)

    # Module contract requires NCHW; the kernel output stays lane-dense and we
    # pay a single transposing copy here.
    out = out_flat.reshape(N, H, W, coutp)[..., :C_out]
    return jnp.transpose(out, (0, 3, 1, 2))


def _reference(x, weight, bias, gamma, beta):
    # Pure-JAX reference (for correctness check only).
    y = jax.lax.conv_general_dilated(
        x, weight, window_strides=(1, 1), padding=((1, 1), (1, 1)),
        dimension_numbers=("NCHW", "OIHW", "NCHW"))
    y = y + bias[None, :, None, None]
    mean = jnp.mean(y, axis=(0, 2, 3), keepdims=True)
    var = jnp.var(y, axis=(0, 2, 3), keepdims=True)
    y_hat = (y - mean) * jax.lax.rsqrt(var + EPS)
    return jnp.maximum(y_hat * gamma[None, :, None, None]
                       + beta[None, :, None, None], 0.0)


if __name__ == "__main__":
    # Small shapes: N=2, C_in=4, C_out=8, H=W=16
    N, C_in, C_out, H, W = 2, 4, 8, 16, 16
    KH = KW = 3

    key = jax.random.PRNGKey(0)
    kx_, kw_, kb_ = jax.random.split(key, 3)

    x = jax.random.normal(kx_, (N, C_in, H, W), dtype=jnp.float32)
    # Deterministic "kaiming-uniform-ish" conv params (synthetic, not a checkpoint).
    fan_in = C_in * KH * KW
    bound = 1.0 / (fan_in ** 0.5)
    weight = jax.random.uniform(kw_, (C_out, C_in, KH, KW),
                                minval=-bound, maxval=bound, dtype=jnp.float32)
    bias = jax.random.uniform(kb_, (C_out,), minval=-bound, maxval=bound,
                              dtype=jnp.float32)
    # BatchNorm2d default init: gamma=1, beta=0.
    gamma = jnp.ones((C_out,), dtype=jnp.float32)
    beta = jnp.zeros((C_out,), dtype=jnp.float32)

    fwd = jax.jit(conv_batch_norm)
    out = jax.block_until_ready(fwd(x, weight, bias, gamma, beta))

    ref = jax.block_until_ready(_reference(x, weight, bias, gamma, beta))
    assert out.shape == (N, C_out, H, W)
    assert jnp.allclose(out, ref, atol=1e-4, rtol=1e-4), (
        f"max abs err {jnp.max(jnp.abs(out - ref))}")

    print("KERNEL_OK")
</pallas_src>

<mosaic_0001>
module attributes {stable_mosaic.version = 11 : i64} {
  func.func @conv_stats_kernel(%arg0: i32, %arg1: i32, %arg2: memref<1x1x18x4xf32, #tpu.memory_space<vmem>>, %arg3: memref<1x1x18x4xf32, #tpu.memory_space<vmem>>, %arg4: memref<1x1x18x4xf32, #tpu.memory_space<vmem>>, %arg5: memref<3x3x4x128xf32, #tpu.memory_space<vmem>>, %arg6: memref<1x1x16x128xf32, #tpu.memory_space<vmem>>, %arg7: memref<1x1x2x128xf32, #tpu.memory_space<vmem>>) attributes {dimension_semantics = [#tpu.dimension_semantics<parallel>, #tpu.dimension_semantics<parallel>], iteration_bounds = array<i64: 2, 16>, scalar_prefetch = 0 : i64, scratch_operands = 0 : i64, tpu.core_type = #tpu.core_type<tc>, window_params = [{transform_indices = @transform_0, window_bounds = array<i64: 1, 1, 18, 4>}, {transform_indices = @transform_1, window_bounds = array<i64: 1, 1, 18, 4>}, {transform_indices = @transform_2, window_bounds = array<i64: 1, 1, 18, 4>}, {pipeline_mode = #tpu.pipeline_mode<synchronous>, transform_indices = @transform_3, window_bounds = array<i64: 3, 3, 4, 128>}, {transform_indices = @transform_4, window_bounds = array<i64: 1, 1, 16, 128>}, {transform_indices = @transform_5, window_bounds = array<i64: 1, 1, 2, 128>}]} {
    %c0 = arith.constant 0 : index
    %c0_0 = arith.constant 0 : index
    %c0_1 = arith.constant 0 : index
    %c0_2 = arith.constant 0 : index
    %0 = vector.load %arg2[%c0, %c0_0, %c0_1, %c0_2] : memref<1x1x18x4xf32, #tpu.memory_space<vmem>>, vector<1x1x18x4xf32>
    %1 = vector.shape_cast %0 : vector<1x1x18x4xf32> to vector<18x4xf32>
    %c0_3 = arith.constant 0 : index
    %c0_4 = arith.constant 0 : index
    %c0_5 = arith.constant 0 : index
    %c0_6 = arith.constant 0 : index
    %2 = vector.load %arg3[%c0_3, %c0_4, %c0_5, %c0_6] : memref<1x1x18x4xf32, #tpu.memory_space<vmem>>, vector<1x1x18x4xf32>
    %3 = vector.shape_cast %2 : vector<1x1x18x4xf32> to vector<18x4xf32>
    %c0_7 = arith.constant 0 : index
    %c0_8 = arith.constant 0 : index
    %c0_9 = arith.constant 0 : index
    %c0_10 = arith.constant 0 : index
    %4 = vector.load %arg4[%c0_7, %c0_8, %c0_9, %c0_10] : memref<1x1x18x4xf32, #tpu.memory_space<vmem>>, vector<1x1x18x4xf32>
    %5 = vector.shape_cast %4 : vector<1x1x18x4xf32> to vector<18x4xf32>
    %cst = arith.constant 0.000000e+00 : f32
    %6 = vector.broadcast %cst : f32 to vector<16x128xf32>
    %7 = vector.extract_strided_slice %1 {offsets = [0, 0], sizes = [16, 4], strides = [1, 1]} : vector<18x4xf32> to vector<16x4xf32>
    %c0_11 = arith.constant 0 : index
    %c0_12 = arith.constant 0 : index
    %c0_13 = arith.constant 0 : index
    %c0_14 = arith.constant 0 : index
    %8 = vector.load %arg5[%c0_11, %c0_12, %c0_13, %c0_14] : memref<3x3x4x128xf32, #tpu.memory_space<vmem>>, vector<1x1x4x128xf32>
    %9 = vector.shape_cast %8 : vector<1x1x4x128xf32> to vector<4x128xf32>
    %cst_15 = arith.constant dense<0.000000e+00> : vector<16x128xf32>
    %10 = tpu.matmul %7, %9, %cst_15 {dimension_numbers = #tpu.dot_dimension_numbers<[1], [0], [0], [1], [0, 0, 1, 1], [], []>} : vector<16x4xf32>, vector<4x128xf32>, vector<16x128xf32> -> vector<16x128xf32>
    %11 = arith.addf %6, %10 : vector<16x128xf32>
    %12 = vector.extract_strided_slice %1 {offsets = [1, 0], sizes = [16, 4], strides = [1, 1]} : vector<18x4xf32> to vector<16x4xf32>
    %c0_16 = arith.constant 0 : index
    %c1 = arith.constant 1 : index
    %c0_17 = arith.constant 0 : index
    %c0_18 = arith.constant 0 : index
    %13 = vector.load %arg5[%c0_16, %c1, %c0_17, %c0_18] : memref<3x3x4x128xf32, #tpu.memory_space<vmem>>, vector<1x1x4x128xf32>
    %14 = vector.shape_cast %13 : vector<1x1x4x128xf32> to vector<4x128xf32>
    %cst_19 = arith.constant dense<0.000000e+00> : vector<16x128xf32>
    %15 = tpu.matmul %12, %14, %cst_19 {dimension_numbers = #tpu.dot_dimension_numbers<[1], [0], [0], [1], [0, 0, 1, 1], [], []>} : vector<16x4xf32>, vector<4x128xf32>, vector<16x128xf32> -> vector<16x128xf32>
    %16 = arith.addf %11, %15 : vector<16x128xf32>
    %17 = vector.extract_strided_slice %1 {offsets = [2, 0], sizes = [16, 4], strides = [1, 1]} : vector<18x4xf32> to vector<16x4xf32>
    %c0_20 = arith.constant 0 : index
    %c2 = arith.constant 2 : index
    %c0_21 = arith.constant 0 : index
    %c0_22 = arith.constant 0 : index
    %18 = vector.load %arg5[%c0_20, %c2, %c0_21, %c0_22] : memref<3x3x4x128xf32, #tpu.memory_space<vmem>>, vector<1x1x4x128xf32>
    %19 = vector.shape_cast %18 : vector<1x1x4x128xf32> to vector<4x128xf32>
    %cst_23 = arith.constant dense<0.000000e+00> : vector<16x128xf32>
    %20 = tpu.matmul %17, %19, %cst_23 {dimension_numbers = #tpu.dot_dimension_numbers<[1], [0], [0], [1], [0, 0, 1, 1], [], []>} : vector<16x4xf32>, vector<4x128xf32>, vector<16x128xf32> -> vector<16x128xf32>
    %21 = arith.addf %16, %20 : vector<16x128xf32>
    %22 = vector.extract_strided_slice %3 {offsets = [0, 0], sizes = [16, 4], strides = [1, 1]} : vector<18x4xf32> to vector<16x4xf32>
    %c1_24 = arith.constant 1 : index
    %c0_25 = arith.constant 0 : index
    %c0_26 = arith.constant 0 : index
    %c0_27 = arith.constant 0 : index
    %23 = vector.load %arg5[%c1_24, %c0_25, %c0_26, %c0_27] : memref<3x3x4x128xf32, #tpu.memory_space<vmem>>, vector<1x1x4x128xf32>
    %24 = vector.shape_cast %23 : vector<1x1x4x128xf32> to vector<4x128xf32>
    %cst_28 = arith.constant dense<0.000000e+00> : vector<16x128xf32>
    %25 = tpu.matmul %22, %24, %cst_28 {dimension_numbers = #tpu.dot_dimension_numbers<[1], [0], [0], [1], [0, 0, 1, 1], [], []>} : vector<16x4xf32>, vector<4x128xf32>, vector<16x128xf32> -> vector<16x128xf32>
    %26 = arith.addf %21, %25 : vector<16x128xf32>
    %27 = vector.extract_strided_slice %3 {offsets = [1, 0], sizes = [16, 4], strides = [1, 1]} : vector<18x4xf32> to vector<16x4xf32>
    %c1_29 = arith.constant 1 : index
    %c1_30 = arith.constant 1 : index
    %c0_31 = arith.constant 0 : index
    %c0_32 = arith.constant 0 : index
    %28 = vector.load %arg5[%c1_29, %c1_30, %c0_31, %c0_32] : memref<3x3x4x128xf32, #tpu.memory_space<vmem>>, vector<1x1x4x128xf32>
    %29 = vector.shape_cast %28 : vector<1x1x4x128xf32> to vector<4x128xf32>
    %cst_33 = arith.constant dense<0.000000e+00> : vector<16x128xf32>
    %30 = tpu.matmul %27, %29, %cst_33 {dimension_numbers = #tpu.dot_dimension_numbers<[1], [0], [0], [1], [0, 0, 1, 1], [], []>} : vector<16x4xf32>, vector<4x128xf32>, vector<16x128xf32> -> vector<16x128xf32>
    %31 = arith.addf %26, %30 : vector<16x128xf32>
    %32 = vector.extract_strided_slice %3 {offsets = [2, 0], sizes = [16, 4], strides = [1, 1]} : vector<18x4xf32> to vector<16x4xf32>
    %c1_34 = arith.constant 1 : index
    %c2_35 = arith.constant 2 : index
    %c0_36 = arith.constant 0 : index
    %c0_37 = arith.constant 0 : index
    %33 = vector.load %arg5[%c1_34, %c2_35, %c0_36, %c0_37] : memref<3x3x4x128xf32, #tpu.memory_space<vmem>>, vector<1x1x4x128xf32>
    %34 = vector.shape_cast %33 : vector<1x1x4x128xf32> to vector<4x128xf32>
    %cst_38 = arith.constant dense<0.000000e+00> : vector<16x128xf32>
    %35 = tpu.matmul %32, %34, %cst_38 {dimension_numbers = #tpu.dot_dimension_numbers<[1], [0], [0], [1], [0, 0, 1, 1], [], []>} : vector<16x4xf32>, vector<4x128xf32>, vector<16x128xf32> -> vector<16x128xf32>
    %36 = arith.addf %31, %35 : vector<16x128xf32>
    %37 = vector.extract_strided_slice %5 {offsets = [0, 0], sizes = [16, 4], strides = [1, 1]} : vector<18x4xf32> to vector<16x4xf32>
    %c2_39 = arith.constant 2 : index
    %c0_40 = arith.constant 0 : index
    %c0_41 = arith.constant 0 : index
    %c0_42 = arith.constant 0 : index
    %38 = vector.load %arg5[%c2_39, %c0_40, %c0_41, %c0_42] : memref<3x3x4x128xf32, #tpu.memory_space<vmem>>, vector<1x1x4x128xf32>
    %39 = vector.shape_cast %38 : vector<1x1x4x128xf32> to vector<4x128xf32>
    %cst_43 = arith.constant dense<0.000000e+00> : vector<16x128xf32>
    %40 = tpu.matmul %37, %39, %cst_43 {dimension_numbers = #tpu.dot_dimension_numbers<[1], [0], [0], [1], [0, 0, 1, 1], [], []>} : vector<16x4xf32>, vector<4x128xf32>, vector<16x128xf32> -> vector<16x128xf32>
    %41 = arith.addf %36, %40 : vector<16x128xf32>
    %42 = vector.extract_strided_slice %5 {offsets = [1, 0], sizes = [16, 4], strides = [1, 1]} : vector<18x4xf32> to vector<16x4xf32>
    %c2_44 = arith.constant 2 : index
    %c1_45 = arith.constant 1 : index
    %c0_46 = arith.constant 0 : index
    %c0_47 = arith.constant 0 : index
    %43 = vector.load %arg5[%c2_44, %c1_45, %c0_46, %c0_47] : memref<3x3x4x128xf32, #tpu.memory_space<vmem>>, vector<1x1x4x128xf32>
    %44 = vector.shape_cast %43 : vector<1x1x4x128xf32> to vector<4x128xf32>
    %cst_48 = arith.constant dense<0.000000e+00> : vector<16x128xf32>
    %45 = tpu.matmul %42, %44, %cst_48 {dimension_numbers = #tpu.dot_dimension_numbers<[1], [0], [0], [1], [0, 0, 1, 1], [], []>} : vector<16x4xf32>, vector<4x128xf32>, vector<16x128xf32> -> vector<16x128xf32>
    %46 = arith.addf %41, %45 : vector<16x128xf32>
    %47 = vector.extract_strided_slice %5 {offsets = [2, 0], sizes = [16, 4], strides = [1, 1]} : vector<18x4xf32> to vector<16x4xf32>
    %c2_49 = arith.constant 2 : index
    %c2_50 = arith.constant 2 : index
    %c0_51 = arith.constant 0 : index
    %c0_52 = arith.constant 0 : index
    %48 = vector.load %arg5[%c2_49, %c2_50, %c0_51, %c0_52] : memref<3x3x4x128xf32, #tpu.memory_space<vmem>>, vector<1x1x4x128xf32>
    %49 = vector.shape_cast %48 : vector<1x1x4x128xf32> to vector<4x128xf32>
    %cst_53 = arith.constant dense<0.000000e+00> : vector<16x128xf32>
    %50 = tpu.matmul %47, %49, %cst_53 {dimension_numbers = #tpu.dot_dimension_numbers<[1], [0], [0], [1], [0, 0, 1, 1], [], []>} : vector<16x4xf32>, vector<4x128xf32>, vector<16x128xf32> -> vector<16x128xf32>
    %51 = arith.addf %46, %50 : vector<16x128xf32>
    %c0_54 = arith.constant 0 : index
    %c0_55 = arith.constant 0 : index
    %c0_56 = arith.constant 0 : index
    %c0_57 = arith.constant 0 : index
    %52 = vector.load %arg6[%c0_54, %c0_55, %c0_56, %c0_57] : memref<1x1x16x128xf32, #tpu.memory_space<vmem>>, vector<1x1x16x128xf32>
    %53 = vector.shape_cast %52 : vector<1x1x16x128xf32> to vector<16x128xf32>
    %54 = vector.shape_cast %51 : vector<16x128xf32> to vector<1x1x16x128xf32>
    tpu.vector_store %arg6[%c0_54, %c0_55, %c0_56, %c0_57], %54 {strides = array<i32>} : memref<1x1x16x128xf32, #tpu.memory_space<vmem>>, vector<1x1x16x128xf32>,
    %cst_58 = arith.constant dense<0.000000e+00> : vector<128xf32>
    %55 = vector.multi_reduction <add>, %51, %cst_58 [0] : vector<16x128xf32> to vector<128xf32>
    %56 = vector.shape_cast %55 : vector<128xf32> to vector<1x128xf32>
    %57 = arith.mulf %51, %51 : vector<16x128xf32>
    %cst_59 = arith.constant dense<0.000000e+00> : vector<128xf32>
    %58 = vector.multi_reduction <add>, %57, %cst_59 [0] : vector<16x128xf32> to vector<128xf32>
    %59 = vector.shape_cast %58 : vector<128xf32> to vector<1x128xf32>
    %60 = tpu.concatenate %56, %59 in 0 : vector<1x128xf32>, vector<1x128xf32> -> vector<2x128xf32>
    %c0_60 = arith.constant 0 : index
    %c0_61 = arith.constant 0 : index
    %c0_62 = arith.constant 0 : index
    %c0_63 = arith.constant 0 : index
    %61 = vector.load %arg7[%c0_60, %c0_61, %c0_62, %c0_63] : memref<1x1x2x128xf32, #tpu.memory_space<vmem>>, vector<1x1x2x128xf32>
    %62 = vector.shape_cast %61 : vector<1x1x2x128xf32> to vector<2x128xf32>
    %63 = vector.shape_cast %60 : vector<2x128xf32> to vector<1x1x2x128xf32>
    tpu.vector_store %arg7[%c0_60, %c0_61, %c0_62, %c0_63], %63 {strides = array<i32>} : memref<1x1x2x128xf32, #tpu.memory_space<vmem>>, vector<1x1x2x128xf32>,
    return
  }
  func.func @transform_0(%arg0: i32, %arg1: i32) -> (i32, i32, i32, i32) {
    %c0_i32 = arith.constant 0 : i32
    %0 = arith.addi %arg1, %c0_i32 : i32
    %c0_i32_0 = arith.constant 0 : i32
    %c0_i32_1 = arith.constant 0 : i32
    %c0_i32_2 = arith.constant 0 : i32
    return %arg0, %0, %c0_i32_0, %c0_i32_1 : i32, i32, i32, i32
  }
  func.func @transform_1(%arg0: i32, %arg1: i32) -> (i32, i32, i32, i32) {
    %c1_i32 = arith.constant 1 : i32
    %0 = arith.addi %arg1, %c1_i32 : i32
    %c0_i32 = arith.constant 0 : i32
    %c0_i32_0 = arith.constant 0 : i32
    %c0_i32_1 = arith.constant 0 : i32
    return %arg0, %0, %c0_i32, %c0_i32_0 : i32, i32, i32, i32
  }
  func.func @transform_2(%arg0: i32, %arg1: i32) -> (i32, i32, i32, i32) {
    %c2_i32 = arith.constant 2 : i32
    %0 = arith.addi %arg1, %c2_i32 : i32
    %c0_i32 = arith.constant 0 : i32
    %c0_i32_0 = arith.constant 0 : i32
    %c0_i32_1 = arith.constant 0 : i32
    return %arg0, %0, %c0_i32, %c0_i32_0 : i32, i32, i32, i32
  }
  func.func @transform_3(%arg0: i32, %arg1: i32) -> (i32, i32, i32, i32) {
    %c0_i32 = arith.constant 0 : i32
    %c0_i32_0 = arith.constant 0 : i32
    %c0_i32_1 = arith.constant 0 : i32
    %c0_i32_2 = arith.constant 0 : i32
    %c0_i32_3 = arith.constant 0 : i32
    return %c0_i32, %c0_i32_0, %c0_i32_1, %c0_i32_2 : i32, i32, i32, i32
  }
  func.func @transform_4(%arg0: i32, %arg1: i32) -> (i32, i32, i32, i32) {
    %c0_i32 = arith.constant 0 : i32
    %c0_i32_0 = arith.constant 0 : i32
    %c0_i32_1 = arith.constant 0 : i32
    return %arg0, %arg1, %c0_i32, %c0_i32_0 : i32, i32, i32, i32
  }
  func.func @transform_5(%arg0: i32, %arg1: i32) -> (i32, i32, i32, i32) {
    %c0_i32 = arith.constant 0 : i32
    %c0_i32_0 = arith.constant 0 : i32
    %c0_i32_1 = arith.constant 0 : i32
    return %arg0, %arg1, %c0_i32, %c0_i32_0 : i32, i32, i32, i32
  }
}

module attributes {stable_mosaic.version = 11 : i64} {
  func.func @bn_relu_kernel(%arg0: i32, %arg1: memref<512x128xf32, #tpu.memory_space<vmem>>, %arg2: memref<1x128xf32, #tpu.memory_space<vmem>>, %arg3: memref<1x128xf32, #tpu.memory_space<vmem>>, %arg4: memref<512x128xf32, #tpu.memory_space<vmem>>) attributes {dimension_semantics = [#tpu.dimension_semantics<parallel>], iteration_bounds = array<i64: 1>, scalar_prefetch = 0 : i64, scratch_operands = 0 : i64, tpu.core_type = #tpu.core_type<tc>, window_params = [{transform_indices = @transform_0, window_bounds = array<i64: 512, 128>}, {pipeline_mode = #tpu.pipeline_mode<synchronous>, transform_indices = @transform_1, window_bounds = array<i64: 1, 128>}, {pipeline_mode = #tpu.pipeline_mode<synchronous>, transform_indices = @transform_2, window_bounds = array<i64: 1, 128>}, {transform_indices = @transform_3, window_bounds = array<i64: 512, 128>}]} {
    %c0 = arith.constant 0 : index
    %c0_0 = arith.constant 0 : index
    %0 = vector.load %arg1[%c0, %c0_0] : memref<512x128xf32, #tpu.memory_space<vmem>>, vector<512x128xf32>
    %c0_1 = arith.constant 0 : index
    %c0_2 = arith.constant 0 : index
    %1 = vector.load %arg2[%c0_1, %c0_2] : memref<1x128xf32, #tpu.memory_space<vmem>>, vector<1x128xf32>
    %2 = vector.broadcast %1 : vector<1x128xf32> to vector<512x128xf32>
    %3 = arith.mulf %0, %2 : vector<512x128xf32>
    %c0_3 = arith.constant 0 : index
    %c0_4 = arith.constant 0 : index
    %4 = vector.load %arg3[%c0_3, %c0_4] : memref<1x128xf32, #tpu.memory_space<vmem>>, vector<1x128xf32>
    %5 = vector.broadcast %4 : vector<1x128xf32> to vector<512x128xf32>
    %6 = arith.addf %3, %5 : vector<512x128xf32>
    %cst = arith.constant 0.000000e+00 : f32
    %7 = vector.broadcast %cst : f32 to vector<512x128xf32>
    %8 = arith.maximumf %6, %7 : vector<512x128xf32>
    %c0_5 = arith.constant 0 : index
    %c0_6 = arith.constant 0 : index
    %9 = vector.load %arg4[%c0_5, %c0_6] : memref<512x128xf32, #tpu.memory_space<vmem>>, vector<512x128xf32>
    tpu.vector_store %arg4[%c0_5, %c0_6], %8 {strides = array<i32>} : memref<512x128xf32, #tpu.memory_space<vmem>>, vector<512x128xf32>,
    return
  }
  func.func @transform_0(%arg0: i32) -> (i32, i32) {
    %c0_i32 = arith.constant 0 : i32
    %c0_i32_0 = arith.constant 0 : i32
    return %arg0, %c0_i32 : i32, i32
  }
  func.func @transform_1(%arg0: i32) -> (i32, i32) {
    %c0_i32 = arith.constant 0 : i32
    %c0_i32_0 = arith.constant 0 : i32
    %c0_i32_1 = arith.constant 0 : i32
    return %c0_i32, %c0_i32_0 : i32, i32
  }
  func.func @transform_2(%arg0: i32) -> (i32, i32) {
    %c0_i32 = arith.constant 0 : i32
    %c0_i32_0 = arith.constant 0 : i32
    %c0_i32_1 = arith.constant 0 : i32
    return %c0_i32, %c0_i32_0 : i32, i32
  }
  func.func @transform_3(%arg0: i32) -> (i32, i32) {
    %c0_i32 = arith.constant 0 : i32
    %c0_i32_0 = arith.constant 0 : i32
    return %arg0, %c0_i32 : i32, i32
  }
}

</mosaic_0001>

<llo_original>
// kernel: conv_batch_norm.3
$region0: #{conv_batch_norm.3}
  #allocation0 [shape = 'u32[]', space=smem, size = 0x4, offset = 0x4, fixed_abs, tag = 'smem constant byte address 0x4 - core index']
  #allocation1 [shape = 'u32[144,128]{1,0:T(1,128)}', space=vmem, size = 0x12000, scoped, tag = 'internal scratch']
  %s0 = inlined_call_operand.vmem [shape: f32[512,128], index: 0, kind: input, shape index: {}, may-alias: {0,3}]
  %s1 = inlined_call_operand.vmem [shape: f32[1,128], index: 1, kind: input, shape index: {}]
  %s2 = inlined_call_operand.vmem [shape: f32[1,128], index: 2, kind: input, shape index: {}]
  %s3 = inlined_call_operand.vmem [shape: f32[512,128], index: 3, kind: output, shape index: {}, may-alias: {0,3}]
  %s4 = sld [smem:[#allocation0]]
  $region22: #{conv_batch_norm.3} parent=0
    _
  %s6 = ssub.s32 1, %s4
  %s7 = scalar_select 0, %s6, %s4
  // Predicated region
  $region2: #{conv_batch_norm.3} parent=0 // pred_check
    _
  $region3: #{conv_batch_norm.3} parent=0 // pred_check_branch
    %9 = sbr.rel (0) target = $region5
  $region4: #{conv_batch_norm.3} parent=0 // pred_region
    _
  $region5: #{conv_batch_norm.3} parent=0 // pred_fallthru
    _
  // Predicated region
  $region6: #{conv_batch_norm.3} parent=0 // pred_check
    _
  $region7: #{conv_batch_norm.3} parent=0 // pred_check_branch
    %11 = sbr.rel (0) target = $region9
  $region8: #{conv_batch_norm.3} parent=0 // pred_region
    _
  $region9: #{conv_batch_norm.3} parent=0 // pred_fallthru
    _
  // Predicated region
  $region10: #{conv_batch_norm.3} parent=0 // pred_check
    _
  $region11: #{conv_batch_norm.3} parent=0 // pred_check_branch
    %13 = sbr.rel (0) target = $region13
  $region12: #{conv_batch_norm.3} parent=0 // pred_region
    _
  $region13: #{conv_batch_norm.3} parent=0 // pred_fallthru
    _
  %v14 = vld [vmem:[%s0] sm:$0xff]
  %v15 = vld [vmem:[%s0 + $0x8] sm:$0xff]
  %v16 = vld [vmem:[%s0 + $0x10] sm:$0xff]
  %v17 = vld [vmem:[%s0 + $0x18] sm:$0xff]
  %v18 = vld [vmem:[%s0 + $0x20] sm:$0xff]
  %v19 = vld [vmem:[%s0 + $0x28] sm:$0xff]
  %v20 = vld [vmem:[%s0 + $0x30] sm:$0xff]
  %v21 = vld [vmem:[%s0 + $0x38] sm:$0xff]
  %v22 = vld [vmem:[%s0 + $0x40] sm:$0xff]
  %v23 = vld [vmem:[%s0 + $0x48] sm:$0xff]
  %v24 = vld [vmem:[%s0 + $0x50] sm:$0xff]
  %v25 = vld [vmem:[%s0 + $0x58] sm:$0xff]
  %v26 = vld [vmem:[%s0 + $0x60] sm:$0xff]
  %v27 = vld [vmem:[%s0 + $0x68] sm:$0xff]
  %v28 = vld [vmem:[%s0 + $0x70] sm:$0xff]
  %v29 = vld [vmem:[%s0 + $0x78] sm:$0xff]
  %v30 = vld [vmem:[%s0 + $0x80] sm:$0xff]
  %v31 = vld [vmem:[%s0 + $0x88] sm:$0xff]
  %v32 = vld [vmem:[%s0 + $0x90] sm:$0xff]
  %v33 = vld [vmem:[%s0 + $0x98] sm:$0xff]
  %v34 = vld [vmem:[%s0 + $0xa0] sm:$0xff]
  %v35 = vld [vmem:[%s0 + $0xa8] sm:$0xff]
  %v36 = vld [vmem:[%s0 + $0xb0] sm:$0xff]
  %v37 = vld [vmem:[%s0 + $0xb8] sm:$0xff]
  %v38 = vld [vmem:[%s0 + $0xc0] sm:$0xff]
  %v39 = vld [vmem:[%s0 + $0xc8] sm:$0xff]
  %v40 = vld [vmem:[%s0 + $0xd0] sm:$0xff]
  %v41 = vld [vmem:[%s0 + $0xd8] sm:$0xff]
  %v42 = vld [vmem:[%s0 + $0xe0] sm:$0xff]
  %v43 = vld [vmem:[%s0 + $0xe8] sm:$0xff]
  %v44 = vld [vmem:[%s0 + $0xf0] sm:$0xff]
  %v45 = vld [vmem:[%s0 + $0xf8] sm:$0xff]
  %v46 = vld [vmem:[%s0 + $0x100] sm:$0xff]
  %v47 = vld [vmem:[%s0 + $0x108] sm:$0xff]
  %v48 = vld [vmem:[%s0 + $0x110] sm:$0xff]
  %v49 = vld [vmem:[%s0 + $0x118] sm:$0xff]
  %v50 = vld [vmem:[%s0 + $0x120] sm:$0xff]
  %v51 = vld [vmem:[%s0 + $0x128] sm:$0xff]
  %v52 = vld [vmem:[%s0 + $0x130] sm:$0xff]
  %v53 = vld [vmem:[%s0 + $0x138] sm:$0xff]
  %v54 = vld [vmem:[%s0 + $0x140] sm:$0xff]
  %v55 = vld [vmem:[%s0 + $0x148] sm:$0xff]
  %v56 = vld [vmem:[%s0 + $0x150] sm:$0xff]
  %v57 = vld [vmem:[%s0 + $0x158] sm:$0xff]
  %v58 = vld [vmem:[%s0 + $0x160] sm:$0xff]
  %v59 = vld [vmem:[%s0 + $0x168] sm:$0xff]
  %v60 = vld [vmem:[%s0 + $0x170] sm:$0xff]
  %v61 = vld [vmem:[%s0 + $0x178] sm:$0xff]
  %v62 = vld [vmem:[%s0 + $0x180] sm:$0xff]
  %v63 = vld [vmem:[%s0 + $0x188] sm:$0xff]
  %v64 = vld [vmem:[%s0 + $0x190] sm:$0xff]
  %v65 = vld [vmem:[%s0 + $0x198] sm:$0xff]
  %v66 = vld [vmem:[%s0 + $0x1a0] sm:$0xff]
  %v67 = vld [vmem:[%s0 + $0x1a8] sm:$0xff]
  %v68 = vld [vmem:[%s0 + $0x1b0] sm:$0xff]
  %v69 = vld [vmem:[%s0 + $0x1b8] sm:$0xff]
  %v70 = vld [vmem:[%s0 + $0x1c0] sm:$0xff]
  %v71 = vld [vmem:[%s0 + $0x1c8] sm:$0xff]
  %v72 = vld [vmem:[%s0 + $0x1d0] sm:$0xff]
  %v73 = vld [vmem:[%s0 + $0x1d8] sm:$0xff]
  %v74 = vld [vmem:[%s0 + $0x1e0] sm:$0xff]
  %v75 = vld [vmem:[%s0 + $0x1e8] sm:$0xff]
  %v76 = vld [vmem:[%s0 + $0x1f0] sm:$0xff]
  %v77 = vld [vmem:[%s0 + $0x1f8] sm:$0xff]
  %v78 = vld [vmem:[%s1] sm:$0x1]
  %v80 = vlaneseq
  %v81 = vshrl.u32 %v80, 7
  %v82 = vsub.s32 0, %v81
  %v83 = vrot.slane %v78, %v82
  %v85 = vmul.f32 %v14, %v83
  %v86 = vmul.f32 %v15, %v83
  %v87 = vmul.f32 %v16, %v83
  %v88 = vmul.f32 %v17, %v83
  %v89 = vmul.f32 %v18, %v83
  %v90 = vmul.f32 %v19, %v83
  %v91 = vmul.f32 %v20, %v83
  %v92 = vmul.f32 %v21, %v83
  %v93 = vmul.f32 %v22, %v83
  %v94 = vmul.f32 %v23, %v83
  %v95 = vmul.f32 %v24, %v83
  %v96 = vmul.f32 %v25, %v83
  %v97 = vmul.f32 %v26, %v83
  %v98 = vmul.f32 %v27, %v83
  %v99 = vmul.f32 %v28, %v83
  %v100 = vmul.f32 %v29, %v83
  %v101 = vmul.f32 %v30, %v83
  %v102 = vmul.f32 %v31, %v83
  %v103 = vmul.f32 %v32, %v83
  %v104 = vmul.f32 %v33, %v83
  %v105 = vmul.f32 %v34, %v83
  %v106 = vmul.f32 %v35, %v83
  %v107 = vmul.f32 %v36, %v83
  %v108 = vmul.f32 %v37, %v83
  %v109 = vmul.f32 %v38, %v83
  %v110 = vmul.f32 %v39, %v83
  %v111 = vmul.f32 %v40, %v83
  %v112 = vmul.f32 %v41, %v83
  %v113 = vmul.f32 %v42, %v83
  %v114 = vmul.f32 %v43, %v83
  %v115 = vmul.f32 %v44, %v83
  %v116 = vmul.f32 %v45, %v83
  %v117 = vmul.f32 %v46, %v83
  %v118 = vmul.f32 %v47, %v83
  %v119 = vmul.f32 %v48, %v83
  %v120 = vmul.f32 %v49, %v83
  %v121 = vmul.f32 %v50, %v83
  %v122 = vmul.f32 %v51, %v83
  %v123 = vmul.f32 %v52, %v83
  %v124 = vmul.f32 %v53, %v83
  %v125 = vmul.f32 %v54, %v83
  %v126 = vmul.f32 %v55, %v83
  %v127 = vmul.f32 %v56, %v83
  %v128 = vmul.f32 %v57, %v83
  %v129 = vmul.f32 %v58, %v83
  %v130 = vmul.f32 %v59, %v83
  %v131 = vmul.f32 %v60, %v83
  %v132 = vmul.f32 %v61, %v83
  %v133 = vmul.f32 %v62, %v83
  %v134 = vmul.f32 %v63, %v83
  %v135 = vmul.f32 %v64, %v83
  %v136 = vmul.f32 %v65, %v83
  %v137 = vmul.f32 %v66, %v83
  %v138 = vmul.f32 %v67, %v83
  %v139 = vmul.f32 %v68, %v83
  %v140 = vmul.f32 %v69, %v83
  %v141 = vmul.f32 %v70, %v83
  %v142 = vmul.f32 %v71, %v83
  %v143 = vmul.f32 %v72, %v83
  %v144 = vmul.f32 %v73, %v83
  %v145 = vmul.f32 %v74, %v83
  %v146 = vmul.f32 %v75, %v83
  %v147 = vmul.f32 %v76, %v83
  %v148 = vmul.f32 %v77, %v83
  %v149 = vld [vmem:[%s2] sm:$0x1]
  %v151 = vlaneseq
  %v152 = vshrl.u32 %v151, 7
  %v153 = vsub.s32 0, %v152
  %v154 = vrot.slane %v149, %v153
  %v156 = vadd.f32 %v85, %v154
  %v157 = vadd.f32 %v86, %v154
  %v158 = vadd.f32 %v87, %v154
  %v159 = vadd.f32 %v88, %v154
  %v160 = vadd.f32 %v89, %v154
  %v161 = vadd.f32 %v90, %v154
  %v162 = vadd.f32 %v91, %v154
  %v163 = vadd.f32 %v92, %v154
  %v164 = vadd.f32 %v93, %v154
  %v165 = vadd.f32 %v94, %v154
  %v166 = vadd.f32 %v95, %v154
  %v167 = vadd.f32 %v96, %v154
  %v168 = vadd.f32 %v97, %v154
  %v169 = vadd.f32 %v98, %v154
  %v170 = vadd.f32 %v99, %v154
  %v171 = vadd.f32 %v100, %v154
  %v172 = vadd.f32 %v101, %v154
  %v173 = vadd.f32 %v102, %v154
  %v174 = vadd.f32 %v103, %v154
  %v175 = vadd.f32 %v104, %v154
  %v176 = vadd.f32 %v105, %v154
  %v177 = vadd.f32 %v106, %v154
  %v178 = vadd.f32 %v107, %v154
  %v179 = vadd.f32 %v108, %v154
  %v180 = vadd.f32 %v109, %v154
  %v181 = vadd.f32 %v110, %v154
  %v182 = vadd.f32 %v111, %v154
  %v183 = vadd.f32 %v112, %v154
  %v184 = vadd.f32 %v113, %v154
  %v185 = vadd.f32 %v114, %v154
  %v186 = vadd.f32 %v115, %v154
  %v187 = vadd.f32 %v116, %v154
  %v188 = vadd.f32 %v117, %v154
  %v189 = vadd.f32 %v118, %v154
  %v190 = vadd.f32 %v119, %v154
  %v191 = vadd.f32 %v120, %v154
  %v192 = vadd.f32 %v121, %v154
  %v193 = vadd.f32 %v122, %v154
  %v194 = vadd.f32 %v123, %v154
  %v195 = vadd.f32 %v124, %v154
  %v196 = vadd.f32 %v125, %v154
  %v197 = vadd.f32 %v126, %v154
  %v198 = vadd.f32 %v127, %v154
  %v199 = vadd.f32 %v128, %v154
  %v200 = vadd.f32 %v129, %v154
  %v201 = vadd.f32 %v130, %v154
  %v202 = vadd.f32 %v131, %v154
  %v203 = vadd.f32 %v132, %v154
  %v204 = vadd.f32 %v133, %v154
  %v205 = vadd.f32 %v134, %v154
  %v206 = vadd.f32 %v135, %v154
  %v207 = vadd.f32 %v136, %v154
  %v208 = vadd.f32 %v137, %v154
  %v209 = vadd.f32 %v138, %v154
  %v210 = vadd.f32 %v139, %v154
  %v211 = vadd.f32 %v140, %v154
  %v212 = vadd.f32 %v141, %v154
  %v213 = vadd.f32 %v142, %v154
  %v214 = vadd.f32 %v143, %v154
  %v215 = vadd.f32 %v144, %v154
  %v216 = vadd.f32 %v145, %v154
  %v217 = vadd.f32 %v146, %v154
  %v218 = vadd.f32 %v147, %v154
  %v219 = vadd.f32 %v148, %v154
  %v220 = vmax.f32 %v156, 0.0
  %v221 = vmax.f32 %v157, 0.0
  %v222 = vmax.f32 %v158, 0.0
  %v223 = vmax.f32 %v159, 0.0
  %v224 = vmax.f32 %v160, 0.0
  %v225 = vmax.f32 %v161, 0.0
  %v226 = vmax.f32 %v162, 0.0
  %v227 = vmax.f32 %v163, 0.0
  %v228 = vmax.f32 %v164, 0.0
  %v229 = vmax.f32 %v165, 0.0
  %v230 = vmax.f32 %v166, 0.0
  %v231 = vmax.f32 %v167, 0.0
  %v232 = vmax.f32 %v168, 0.0
  %v233 = vmax.f32 %v169, 0.0
  %v234 = vmax.f32 %v170, 0.0
  %v235 = vmax.f32 %v171, 0.0
  %v236 = vmax.f32 %v172, 0.0
  %v237 = vmax.f32 %v173, 0.0
  %v238 = vmax.f32 %v174, 0.0
  %v239 = vmax.f32 %v175, 0.0
  %v240 = vmax.f32 %v176, 0.0
  %v241 = vmax.f32 %v177, 0.0
  %v242 = vmax.f32 %v178, 0.0
  %v243 = vmax.f32 %v179, 0.0
  %v244 = vmax.f32 %v180, 0.0
  %v245 = vmax.f32 %v181, 0.0
  %v246 = vmax.f32 %v182, 0.0
  %v247 = vmax.f32 %v183, 0.0
  %v248 = vmax.f32 %v184, 0.0
  %v249 = vmax.f32 %v185, 0.0
  %v250 = vmax.f32 %v186, 0.0
  %v251 = vmax.f32 %v187, 0.0
  %v252 = vmax.f32 %v188, 0.0
  %v253 = vmax.f32 %v189, 0.0
  %v254 = vmax.f32 %v190, 0.0
  %v255 = vmax.f32 %v191, 0.0
  %v256 = vmax.f32 %v192, 0.0
  %v257 = vmax.f32 %v193, 0.0
  %v258 = vmax.f32 %v194, 0.0
  %v259 = vmax.f32 %v195, 0.0
  %v260 = vmax.f32 %v196, 0.0
  %v261 = vmax.f32 %v197, 0.0
  %v262 = vmax.f32 %v198, 0.0
  %v263 = vmax.f32 %v199, 0.0
  %v264 = vmax.f32 %v200, 0.0
  %v265 = vmax.f32 %v201, 0.0
  %v266 = vmax.f32 %v202, 0.0
  %v267 = vmax.f32 %v203, 0.0
  %v268 = vmax.f32 %v204, 0.0
  %v269 = vmax.f32 %v205, 0.0
  %v270 = vmax.f32 %v206, 0.0
  %v271 = vmax.f32 %v207, 0.0
  %v272 = vmax.f32 %v208, 0.0
  %v273 = vmax.f32 %v209, 0.0
  %v274 = vmax.f32 %v210, 0.0
  %v275 = vmax.f32 %v211, 0.0
  %v276 = vmax.f32 %v212, 0.0
  %v277 = vmax.f32 %v213, 0.0
  %v278 = vmax.f32 %v214, 0.0
  %v279 = vmax.f32 %v215, 0.0
  %v280 = vmax.f32 %v216, 0.0
  %v281 = vmax.f32 %v217, 0.0
  %v282 = vmax.f32 %v218, 0.0
  %v283 = vmax.f32 %v219, 0.0
  %284 = vst [vmem:[%s3] sm:$0xff] %v220
  %285 = vst [vmem:[%s3 + $0x8] sm:$0xff] %v221
  %286 = vst [vmem:[%s3 + $0x10] sm:$0xff] %v222
  %287 = vst [vmem:[%s3 + $0x18] sm:$0xff] %v223
  %288 = vst [vmem:[%s3 + $0x20] sm:$0xff] %v224
  %289 = vst [vmem:[%s3 + $0x28] sm:$0xff] %v225
  %290 = vst [vmem:[%s3 + $0x30] sm:$0xff] %v226
  %291 = vst [vmem:[%s3 + $0x38] sm:$0xff] %v227
  %292 = vst [vmem:[%s3 + $0x40] sm:$0xff] %v228
  %293 = vst [vmem:[%s3 + $0x48] sm:$0xff] %v229
  %294 = vst [vmem:[%s3 + $0x50] sm:$0xff] %v230
  %295 = vst [vmem:[%s3 + $0x58] sm:$0xff] %v231
  %296 = vst [vmem:[%s3 + $0x60] sm:$0xff] %v232
  %297 = vst [vmem:[%s3 + $0x68] sm:$0xff] %v233
  %298 = vst [vmem:[%s3 + $0x70] sm:$0xff] %v234
  %299 = vst [vmem:[%s3 + $0x78] sm:$0xff] %v235
  %300 = vst [vmem:[%s3 + $0x80] sm:$0xff] %v236
  %301 = vst [vmem:[%s3 + $0x88] sm:$0xff] %v237
  %302 = vst [vmem:[%s3 + $0x90] sm:$0xff] %v238
  %303 = vst [vmem:[%s3 + $0x98] sm:$0xff] %v239
  %304 = vst [vmem:[%s3 + $0xa0] sm:$0xff] %v240
  %305 = vst [vmem:[%s3 + $0xa8] sm:$0xff] %v241
  %306 = vst [vmem:[%s3 + $0xb0] sm:$0xff] %v242
  %307 = vst [vmem:[%s3 + $0xb8] sm:$0xff] %v243
  %308 = vst [vmem:[%s3 + $0xc0] sm:$0xff] %v244
  %309 = vst [vmem:[%s3 + $0xc8] sm:$0xff] %v245
  %310 = vst [vmem:[%s3 + $0xd0] sm:$0xff] %v246
  %311 = vst [vmem:[%s3 + $0xd8] sm:$0xff] %v247
  %312 = vst [vmem:[%s3 + $0xe0] sm:$0xff] %v248
  %313 = vst [vmem:[%s3 + $0xe8] sm:$0xff] %v249
  %314 = vst [vmem:[%s3 + $0xf0] sm:$0xff] %v250
  %315 = vst [vmem:[%s3 + $0xf8] sm:$0xff] %v251
  %316 = vst [vmem:[%s3 + $0x100] sm:$0xff] %v252
  %317 = vst [vmem:[%s3 + $0x108] sm:$0xff] %v253
  %318 = vst [vmem:[%s3 + $0x110] sm:$0xff] %v254
  %319 = vst [vmem:[%s3 + $0x118] sm:$0xff] %v255
  %320 = vst [vmem:[%s3 + $0x120] sm:$0xff] %v256
  %321 = vst [vmem:[%s3 + $0x128] sm:$0xff] %v257
  %322 = vst [vmem:[%s3 + $0x130] sm:$0xff] %v258
  %323 = vst [vmem:[%s3 + $0x138] sm:$0xff] %v259
  %324 = vst [vmem:[%s3 + $0x140] sm:$0xff] %v260
  %325 = vst [vmem:[%s3 + $0x148] sm:$0xff] %v261
  %326 = vst [vmem:[%s3 + $0x150] sm:$0xff] %v262
  %327 = vst [vmem:[%s3 + $0x158] sm:$0xff] %v263
  %328 = vst [vmem:[%s3 + $0x160] sm:$0xff] %v264
  %329 = vst [vmem:[%s3 + $0x168] sm:$0xff] %v265
  %330 = vst [vmem:[%s3 + $0x170] sm:$0xff] %v266
  %331 = vst [vmem:[%s3 + $0x178] sm:$0xff] %v267
  %332 = vst [vmem:[%s3 + $0x180] sm:$0xff] %v268
  %333 = vst [vmem:[%s3 + $0x188] sm:$0xff] %v269
  %334 = vst [vmem:[%s3 + $0x190] sm:$0xff] %v270
  %335 = vst [vmem:[%s3 + $0x198] sm:$0xff] %v271
  %336 = vst [vmem:[%s3 + $0x1a0] sm:$0xff] %v272
  %337 = vst [vmem:[%s3 + $0x1a8] sm:$0xff] %v273
  %338 = vst [vmem:[%s3 + $0x1b0] sm:$0xff] %v274
  %339 = vst [vmem:[%s3 + $0x1b8] sm:$0xff] %v275
  %340 = vst [vmem:[%s3 + $0x1c0] sm:$0xff] %v276
  %341 = vst [vmem:[%s3 + $0x1c8] sm:$0xff] %v277
  %342 = vst [vmem:[%s3 + $0x1d0] sm:$0xff] %v278
  %343 = vst [vmem:[%s3 + $0x1d8] sm:$0xff] %v279
  %344 = vst [vmem:[%s3 + $0x1e0] sm:$0xff] %v280
  %345 = vst [vmem:[%s3 + $0x1e8] sm:$0xff] %v281
  %346 = vst [vmem:[%s3 + $0x1f0] sm:$0xff] %v282
  %347 = vst [vmem:[%s3 + $0x1f8] sm:$0xff] %v283
  // Predicated region
  $region14: #{conv_batch_norm.3} parent=0 // pred_check
    _
  $region15: #{conv_batch_norm.3} parent=0 // pred_check_branch
    %349 = sbr.rel (0) target = $region17
  $region16: #{conv_batch_norm.3} parent=0 // pred_region
    _
  $region17: #{conv_batch_norm.3} parent=0 // pred_fallthru
    _
  // Predicated region
  $region18: #{conv_batch_norm.3} parent=0 // pred_check
    _
  $region19: #{conv_batch_norm.3} parent=0 // pred_check_branch
    %351 = sbr.rel (0) target = $region21
  $region20: #{conv_batch_norm.3} parent=0 // pred_region
    _
  $region21: #{conv_batch_norm.3} parent=0 // pred_fallthru
    _

// kernel: conv_batch_norm.2
$region0: #{conv_batch_norm.2}
  #allocation0 [shape = 'u32[]', space=smem, size = 0x4, offset = 0x4, fixed_abs, tag = 'smem constant byte address 0x4 - core index']
  #allocation1 [shape = 'u32[144,128]{1,0:T(1,128)}', space=vmem, size = 0x12000, scoped, tag = 'internal scratch']
  %s0 = inlined_call_operand.vmem [shape: f32[2,18,18,4], index: 0, kind: input, shape index: {}, may-alias: {0,1,2}]
  %s1 = inlined_call_operand.vmem [shape: f32[2,18,18,4], index: 1, kind: input, shape index: {}, may-alias: {0,1,2}]
  %s2 = inlined_call_operand.vmem [shape: f32[2,18,18,4], index: 2, kind: input, shape index: {}, may-alias: {0,1,2}]
  %s3 = inlined_call_operand.vmem [shape: f32[3,3,4,128], index: 3, kind: input, shape index: {}]
  %s4 = inlined_call_operand.vmem [shape: f32[2,16,16,128], index: 4, kind: output, shape index: {0}]
  %s5 = inlined_call_operand.vmem [shape: f32[2,16,2,128], index: 5, kind: output, shape index: {1}]
  %6 = xla_tuple %s4, %s5
  %s7 = sld [smem:[#allocation0]]
  $region57: #{conv_batch_norm.2} parent=0
    _
  %s9 = ssub.s32 1, %s7
  %s10 = scalar_select 0, %s9, %s7
  loop: start=0, step=1, limit=34
  $region2: #{conv_batch_norm.2} parent=0 // loop_pre_header
    _
  $region3: #{conv_batch_norm.2} parent=0 // loop_header
    %s12 = sphi 0, %s16
    %p13 = scmp.ge.s32.totalorder %s12, 34
    %s19 = sphi 0, %s31
    %s20 = sphi 0, %s27
    %s21 = sphi 0, %s19
    %s22 = sphi 0, %s20
    %s23 = sphi 0, %s21
    %s24 = sphi 0, %s22
    %s36 = sphi 0, %s38
    %s39 = sphi 0, %s36
    %s40 = sphi 0, %s39
    %s56 = sphi 0, %s40
    %s66 = sphi 0, %s68
    %s69 = sphi 0, %s66
    %s70 = sphi 0, %s69
    %s86 = sphi 0, %s70
    %s96 = sphi 0, %s98
    %s99 = sphi 0, %s96
    %s100 = sphi 0, %s99
    %s116 = sphi 0, %s100
    %s120 = sphi 0, %s120
    %s122 = sphi 0, %s120
    %s123 = sphi 0, %s122
    %s137 = sphi 0, %s123
    %s145 = sphi 0, %s147
    %s148 = sphi 0, %s145
    %s149 = sphi 0, %s148
    %s165 = sphi 0, %s149
    %s173 = sphi 0, %s175
    %s176 = sphi 0, %s173
    %s177 = sphi 0, %s176
    %s193 = sphi 0, %s177
  $region4: #{conv_batch_norm.2} parent=0 // loop_header_branch
    %15 = sbr.rel (%p13) target = $region8
  $region5: #{conv_batch_norm.2} parent=0 // loop_body
    %s17 = ssub.s32 %s12, 1
    %s18 = ssub.s32 %s12, 2
    %s25 = sadd.s32 1, %s20
    %p26 = scmp.ge.s32.totalorder %s25, 16
    %s27 = scalar_select %p26, 0, %s25
    %s28 = sadd.s32 1, %s19
    %s29 = scalar_select %p26, %s28, %s19
    %p30 = scmp.ge.s32.totalorder %s29, 2
    %s31 = scalar_select %p30, 0, %s29
    %s32 = ssub.s32 %s19, %s31
    %s33 = ssub.s32 %s20, %s27
    %s34 = sor.u32 %s32, %s33
    %p35 = scmp.eq.s32.totalorder %s34, 0
    %s37 = sadd.s32 %s36, 1
    %s38 = scalar_select %p35, %s36, %s37
    %p41 = pneg %p35
    %p42 = scmp.eq.s32.totalorder %s12, 31
    %p43 = por %p41, %p42
    %p44 = scmp.ne.s32.totalorder %s36, %s39
    %p45 = scmp.eq.s32.totalorder %s12, 0
    %p46 = por %p44, %p45
    %p47 = scmp.ne.s32.totalorder %s36, %s39
    %p48 = scmp.eq.s32.totalorder %s17, 31
    %p49 = por %p47, %p48
    %p50 = scmp.ne.s32.totalorder %s39, %s40
    %p51 = scmp.eq.s32.totalorder %s17, 0
    %p52 = por %p50, %p51
    %p53 = scmp.ne.s32.totalorder %s39, %s40
    %p54 = scmp.eq.s32.totalorder %s18, 31
    %p55 = por %p53, %p54
    %p57 = scmp.ne.s32.totalorder %s40, %s56
    %p58 = scmp.eq.s32.totalorder %s18, 0
    %p59 = por %p57, %p58
    %s60 = sadd.s32 %s20, 1
    %s61 = sadd.s32 %s27, 1
    %s62 = ssub.s32 %s19, %s31
    %s63 = ssub.s32 %s60, %s61
    %s64 = sor.u32 %s62, %s63
    %p65 = scmp.eq.s32.totalorder %s64, 0
    %s67 = sadd.s32 %s66, 1
    %s68 = scalar_select %p65, %s66, %s67
    %p71 = pneg %p65
    %p72 = scmp.eq.s32.totalorder %s12, 31
    %p73 = por %p71, %p72
    %p74 = scmp.ne.s32.totalorder %s66, %s69
    %p75 = scmp.eq.s32.totalorder %s12, 0
    %p76 = por %p74, %p75
    %p77 = scmp.ne.s32.totalorder %s66, %s69
    %p78 = scmp.eq.s32.totalorder %s17, 31
    %p79 = por %p77, %p78
    %p80 = scmp.ne.s32.totalorder %s69, %s70
    %p81 = scmp.eq.s32.totalorder %s17, 0
    %p82 = por %p80, %p81
    %p83 = scmp.ne.s32.totalorder %s69, %s70
    %p84 = scmp.eq.s32.totalorder %s18, 31
    %p85 = por %p83, %p84
    %p87 = scmp.ne.s32.totalorder %s70, %s86
    %p88 = scmp.eq.s32.totalorder %s18, 0
    %p89 = por %p87, %p88
    %s90 = sadd.s32 %s20, 2
    %s91 = sadd.s32 %s27, 2
    %s92 = ssub.s32 %s19, %s31
    %s93 = ssub.s32 %s90, %s91
    %s94 = sor.u32 %s92, %s93
    %p95 = scmp.eq.s32.totalorder %s94, 0
    %s97 = sadd.s32 %s96, 1
    %s98 = scalar_select %p95, %s96, %s97
    %p101 = pneg %p95
    %p102 = scmp.eq.s32.totalorder %s12, 31
    %p103 = por %p101, %p102
    %p104 = scmp.ne.s32.totalorder %s96, %s99
    %p105 = scmp.eq.s32.totalorder %s12, 0
    %p106 = por %p104, %p105
    %p107 = scmp.ne.s32.totalorder %s96, %s99
    %p108 = scmp.eq.s32.totalorder %s17, 31
    %p109 = por %p107, %p108
    %p110 = scmp.ne.s32.totalorder %s99, %s100
    %p111 = scmp.eq.s32.totalorder %s17, 0
    %p112 = por %p110, %p111
    %p113 = scmp.ne.s32.totalorder %s99, %s100
    %p114 = scmp.eq.s32.totalorder %s18, 31
    %p115 = por %p113, %p114
    %p117 = scmp.ne.s32.totalorder %s100, %s116
    %p118 = scmp.eq.s32.totalorder %s18, 0
    %p119 = por %p117, %p118
    %s121 = sadd.s32 %s120, 1
    %p124 = scmp.eq.s32.totalorder %s12, 31
    %p125 = scmp.ne.s32.totalorder %s120, %s122
    %p126 = scmp.eq.s32.totalorder %s12, 0
    %p127 = por %p125, %p126
    %p128 = scmp.ne.s32.totalorder %s120, %s122
    %p129 = scmp.eq.s32.totalorder %s17, 31
    %p130 = por %p128, %p129
    %p131 = scmp.ne.s32.totalorder %s122, %s123
    %p132 = scmp.eq.s32.totalorder %s17, 0
    %p133 = por %p131, %p132
    %p134 = scmp.ne.s32.totalorder %s122, %s123
    %p135 = scmp.eq.s32.totalorder %s18, 31
    %p136 = por %p134, %p135
    %p138 = scmp.ne.s32.totalorder %s123, %s137
    %p139 = scmp.eq.s32.totalorder %s18, 0
    %p140 = por %p138, %p139
    %s141 = ssub.s32 %s19, %s31
    %s142 = ssub.s32 %s20, %s27
    %s143 = sor.u32 %s141, %s142
    %p144 = scmp.eq.s32.totalorder %s143, 0
    %s146 = sadd.s32 %s145, 1
    %s147 = scalar_select %p144, %s145, %s146
    %p150 = pneg %p144
    %p151 = scmp.eq.s32.totalorder %s12, 31
    %p152 = por %p150, %p151
    %p153 = scmp.ne.s32.totalorder %s145, %s148
    %p154 = scmp.eq.s32.totalorder %s12, 0
    %p155 = por %p153, %p154
    %p156 = scmp.ne.s32.totalorder %s145, %s148
    %p157 = scmp.eq.s32.totalorder %s17, 31
    %p158 = por %p156, %p157
    %p159 = scmp.ne.s32.totalorder %s148, %s149
    %p160 = scmp.eq.s32.totalorder %s17, 0
    %p161 = por %p159, %p160
    %p162 = scmp.ne.s32.totalorder %s148, %s149
    %p163 = scmp.eq.s32.totalorder %s18, 31
    %p164 = por %p162, %p163
    %p166 = scmp.ne.s32.totalorder %s149, %s165
    %p167 = scmp.eq.s32.totalorder %s18, 0
    %p168 = por %p166, %p167
    %s169 = ssub.s32 %s19, %s31
    %s170 = ssub.s32 %s20, %s27
    %s171 = sor.u32 %s169, %s170
    %p172 = scmp.eq.s32.totalorder %s171, 0
    %s174 = sadd.s32 %s173, 1
    %s175 = scalar_select %p172, %s173, %s174
    %p178 = pneg %p172
    %p179 = scmp.eq.s32.totalorder %s12, 31
    %p180 = por %p178, %p179
    %p181 = scmp.ne.s32.totalorder %s173, %s176
    %p182 = scmp.eq.s32.totalorder %s12, 0
    %p183 = por %p181, %p182
    %p184 = scmp.ne.s32.totalorder %s173, %s176
    %p185 = scmp.eq.s32.totalorder %s17, 31
    %p186 = por %p184, %p185
    %p187 = scmp.ne.s32.totalorder %s176, %s177
    %p188 = scmp.eq.s32.totalorder %s17, 0
    %p189 = por %p187, %p188
    %p190 = scmp.ne.s32.totalorder %s176, %s177
    %p191 = scmp.eq.s32.totalorder %s18, 31
    %p192 = por %p190, %p191
    %p194 = scmp.ne.s32.totalorder %s177, %s193
    %p195 = scmp.eq.s32.totalorder %s18, 0
    %p196 = por %p194, %p195
    %p197 = scmp.le.s32.totalorder 1, %s12
    %p198 = scmp.lt.s32.totalorder %s12, 33
    %p199 = pnand %p197, %p198
    %p200 = pneg %p199
    // Predicated region
    $region9: #{conv_batch_norm.2} parent=5 // pred_check
      _
    $region10: #{conv_batch_norm.2} parent=5 // pred_check_branch
      %202 = sbr.rel (%p199) target = $region12
    $region11: #{conv_batch_norm.2} parent=5 // pred_region
      %s203 = ssub.s32 %s12, 1
      // Predicated region
      $region13: #{conv_batch_norm.2} parent=11 // pred_check
        %p204 = pneg %p133
      $region14: #{conv_batch_norm.2} parent=11 // pred_check_branch
        %206 = sbr.rel (%p204) target = $region16
      $region15: #{conv_batch_norm.2} parent=11 // pred_region
        _
      $region16: #{conv_batch_norm.2} parent=11 // pred_fallthru
        _
    $region12: #{conv_batch_norm.2} parent=5 // pred_fallthru
      _
    %p207 = scmp.lt.s32.totalorder %s12, 32
    // Predicated region
    $region17: #{conv_batch_norm.2} parent=5 // pred_check
      %p208 = pneg %p207
    $region18: #{conv_batch_norm.2} parent=5 // pred_check_branch
      %210 = sbr.rel (%p208) target = $region20
    $region19: #{conv_batch_norm.2} parent=5 // pred_region
      // Predicated region
      $region21: #{conv_batch_norm.2} parent=19 // pred_check
        %p211 = pneg %p46
      $region22: #{conv_batch_norm.2} parent=19 // pred_check_branch
        %213 = sbr.rel (%p211) target = $region24
      $region23: #{conv_batch_norm.2} parent=19 // pred_region
        %p214 = scmp.lt.s32.totalorder %s19, 1
        %s215 = scalar_select %p214, %s19, 1
        %p216 = scmp.lt.s32.totalorder %s20, 17
        %s217 = scalar_select %p216, %s20, 17
        %s218 = smul.addr %s217, 3
        %s219 = smul.addr %s215, 54
        %s220 = sadd.s32 %s218, %s219
        %s221 = smul.addr %s220, 8
        %s222 = scalar_lea.vmem %s0, %s221
      $region24: #{conv_batch_norm.2} parent=19 // pred_fallthru
        _
      // Predicated region
      $region25: #{conv_batch_norm.2} parent=19 // pred_check
        %p223 = pneg %p76
      $region26: #{conv_batch_norm.2} parent=19 // pred_check_branch
        %225 = sbr.rel (%p223) target = $region28
      $region27: #{conv_batch_norm.2} parent=19 // pred_region
        %s226 = sadd.s32 %s20, 1
        %p227 = scmp.lt.s32.totalorder %s19, 1
        %s228 = scalar_select %p227, %s19, 1
        %p229 = scmp.lt.s32.totalorder %s226, 17
        %s230 = scalar_select %p229, %s226, 17
        %s231 = smul.addr %s230, 3
        %s232 = smul.addr %s228, 54
        %s233 = sadd.s32 %s231, %s232
        %s234 = smul.addr %s233, 8
        %s235 = scalar_lea.vmem %s1, %s234
        %s236 = sadd.s32 %s20, 1
      $region28: #{conv_batch_norm.2} parent=19 // pred_fallthru
        _
      // Predicated region
      $region29: #{conv_batch_norm.2} parent=19 // pred_check
        %p237 = pneg %p106
      $region30: #{conv_batch_norm.2} parent=19 // pred_check_branch
        %239 = sbr.rel (%p237) target = $region32
      $region31: #{conv_batch_norm.2} parent=19 // pred_region
        %s240 = sadd.s32 %s20, 2
        %p241 = scmp.lt.s32.totalorder %s19, 1
        %s242 = scalar_select %p241, %s19, 1
        %p243 = scmp.lt.s32.totalorder %s240, 17
        %s244 = scalar_select %p243, %s240, 17
        %s245 = smul.addr %s244, 3
        %s246 = smul.addr %s242, 54
        %s247 = sadd.s32 %s245, %s246
        %s248 = smul.addr %s247, 8
        %s249 = scalar_lea.vmem %s2, %s248
        %s250 = sadd.s32 %s20, 2
      $region32: #{conv_batch_norm.2} parent=19 // pred_fallthru
        _
    $region20: #{conv_batch_norm.2} parent=5 // pred_fallthru
      _
    %p251 = scmp.le.s32.totalorder 1, %s12
    %p252 = scmp.lt.s32.totalorder %s12, 33
    %p253 = pnand %p251, %p252
    %p254 = pneg %p253
    // Predicated region
    $region33: #{conv_batch_norm.2} parent=5 // pred_check
      _
    $region34: #{conv_batch_norm.2} parent=5 // pred_check_branch
      %256 = sbr.rel (%p253) target = $region36
    $region35: #{conv_batch_norm.2} parent=5 // pred_region
      %s257 = ssub.s32 %s12, 1
      %p258 = scmp.lt.s32.totalorder %s21, 1
      %s259 = scalar_select %p258, %s21, 1
      %p260 = scmp.lt.s32.totalorder %s22, 17
      %s261 = scalar_select %p260, %s22, 17
      %s262 = smul.addr %s261, 3
      %s263 = smul.addr %s259, 54
      %s264 = sadd.s32 %s262, %s263
      %s265 = smul.addr %s264, 8
      %s266 = scalar_lea.vmem %s0, %s265
      %p267 = pneg %p52
      %p268 = pneg %p49
      %s269 = sadd.s32 %s22, 1
      %p270 = scmp.lt.s32.totalorder %s21, 1
      %s271 = scalar_select %p270, %s21, 1
      %p272 = scmp.lt.s32.totalorder %s269, 17
      %s273 = scalar_select %p272, %s269, 17
      %s274 = smul.addr %s273, 3
      %s275 = smul.addr %s271, 54
      %s276 = sadd.s32 %s274, %s275
      %s277 = smul.addr %s276, 8
      %s278 = scalar_lea.vmem %s1, %s277
      %p279 = pneg %p82
      %p280 = pneg %p79
      %s281 = sadd.s32 %s22, 2
      %p282 = scmp.lt.s32.totalorder %s21, 1
      %s283 = scalar_select %p282, %s21, 1
      %p284 = scmp.lt.s32.totalorder %s281, 17
      %s285 = scalar_select %p284, %s281, 17
      %s286 = smul.addr %s285, 3
      %s287 = smul.addr %s283, 54
      %s288 = sadd.s32 %s286, %s287
      %s289 = smul.addr %s288, 8
      %s290 = scalar_lea.vmem %s2, %s289
      %p291 = pneg %p112
      %p292 = pneg %p109
      %p293 = pneg %p133
      %p294 = pneg %p130
      %p295 = pneg %p161
      %p296 = pneg %p158
      %p297 = scmp.lt.s32.totalorder %s21, 1
      %s298 = scalar_select %p297, %s21, 1
      %p299 = scmp.lt.s32.totalorder %s22, 15
      %s300 = scalar_select %p299, %s22, 15
      %s301 = smul.addr %s300, 2
      %s302 = smul.addr %s298, 32
      %s303 = sadd.s32 %s301, %s302
      %s304 = smul.addr %s303, 8
      %s305 = scalar_lea.vmem %s4, %s304
      %p306 = pneg %p189
      %p307 = pneg %p186
      %p308 = scmp.lt.s32.totalorder %s21, 1
      %s309 = scalar_select %p308, %s21, 1
      %p310 = scmp.lt.s32.totalorder %s22, 15
      %s311 = scalar_select %p310, %s22, 15
      %s312 = smul.addr %s309, 16
      %s313 = sadd.s32 %s311, %s312
      %s314 = smul.addr %s313, 2
      %s315 = scalar_lea.vmem %s5, %s314
      %p316 = scmp.lt.s32.totalorder %s21, 1
      %s317 = scalar_select %p316, %s21, 1
      %p318 = scmp.lt.s32.totalorder %s22, 17
      %s319 = scalar_select %p318, %s22, 17
      %s320 = smul.addr %s319, 3
      %s321 = smul.addr %s317, 54
      %s322 = sadd.s32 %s320, %s321
      %s323 = smul.addr %s322, 8
      %s324 = scalar_lea.vmem %s0, %s323
      %s325 = sadd.s32 %s22, 1
      %p326 = scmp.lt.s32.totalorder %s21, 1
      %s327 = scalar_select %p326, %s21, 1
      %p328 = scmp.lt.s32.totalorder %s325, 17
      %s329 = scalar_select %p328, %s325, 17
      %s330 = smul.addr %s329, 3
      %s331 = smul.addr %s327, 54
      %s332 = sadd.s32 %s330, %s331
      %s333 = smul.addr %s332, 8
      %s334 = scalar_lea.vmem %s1, %s333
      %s335 = sadd.s32 %s22, 1
      %s336 = sadd.s32 %s22, 2
      %p337 = scmp.lt.s32.totalorder %s21, 1
      %s338 = scalar_select %p337, %s21, 1
      %p339 = scmp.lt.s32.totalorder %s336, 17
      %s340 = scalar_select %p339, %s336, 17
      %s341 = smul.addr %s340, 3
      %s342 = smul.addr %s338, 54
      %s343 = sadd.s32 %s341, %s342
      %s344 = smul.addr %s343, 8
      %s345 = scalar_lea.vmem %s2, %s344
      %s346 = sadd.s32 %s22, 2
      %p347 = scmp.lt.s32.totalorder %s21, 1
      %s348 = scalar_select %p347, %s21, 1
      %p349 = scmp.lt.s32.totalorder %s22, 15
      %s350 = scalar_select %p349, %s22, 15
      %s351 = smul.addr %s350, 2
      %s352 = smul.addr %s348, 32
      %s353 = sadd.s32 %s351, %s352
      %s354 = smul.addr %s353, 8
      %s355 = scalar_lea.vmem %s4, %s354
      %p356 = scmp.lt.s32.totalorder %s21, 1
      %s357 = scalar_select %p356, %s21, 1
      %p358 = scmp.lt.s32.totalorder %s22, 15
      %s359 = scalar_select %p358, %s22, 15
      %s360 = smul.addr %s357, 16
      %s361 = sadd.s32 %s359, %s360
      %s362 = smul.addr %s361, 2
      %s363 = scalar_lea.vmem %s5, %s362
      %v364 = vld [vmem:[%s324] sm:$0xff]
      %v365 = vld [vmem:[%s324 + $0x8] sm:$0xff]
      %v366 = vld [vmem:[%s324 + $0x10] sm:$0x3]
      %v367 = vld [vmem:[%s334] sm:$0xff]
      %v368 = vld [vmem:[%s334 + $0x8] sm:$0xff]
      %v369 = vld [vmem:[%s334 + $0x10] sm:$0x3]
      %v370 = vld [vmem:[%s345] sm:$0xff]
      %v371 = vld [vmem:[%s345 + $0x8] sm:$0xff]
      %v372 = vld [vmem:[%s345 + $0x10] sm:$0x3]
      %v373 = vld [vmem:[%s3] sm:$0xf]
      %s374 = scalar_lea.vmem %s3, 4
      %v375 = vld [vmem:[%s374] sm:$0xf]
      %vm379 = vcmask 1046528
      %v380 = vrot.slane %v364, 1
      %v381 = vrot.slane %v365, 1
      %v382 = vsel %vm379, %v380, %v381
      %v383 = vrot.slane %v366, 1
      %v384 = vsel %vm379, %v381, %v383
      %vm385 = vcmask 31744
      %v386 = vsel %vm385, %v382, 0
      %v388 = vsel %vm385, %v384, 0
      %vm390 = vcmask 1043456
      %v392 = vsel %vm390, %v375, 0
      %394 = vmatprep.subr.mxu0 0.0
      %395 = vmatpush1.msra.mxu0 0.0
      %396 = vmatprep.subr.mxu0 0.0
      %397 = vmatpush1.msra.mxu0 0.0
      %398 = vmatprep.subr.mxu0 0.0
      %399 = vmatpush1.msra.mxu0 0.0
      %400 = vmatprep.subr.mxu0 0.0
      %401 = vmatpush1.msra.mxu0 0.0
      %402 = vmatprep.subr.mxu0 0.0
      %403 = vmatpush1.msra.mxu0 0.0
      %404 = vmatprep.subr.mxu0 0.0
      %405 = vmatpush1.msra.mxu0 0.0
      %406 = vmatprep.subr.mxu0 0.0
      %407 = vmatpush1.msra.mxu0 0.0
      %408 = vmatprep.subr.mxu0 0.0
      %409 = vmatpush1.msra.mxu0 0.0
      %410 = vmatprep.subr.mxu0 0.0
      %411 = vmatpush1.msra.mxu0 0.0
      %412 = vmatprep.subr.mxu0 0.0
      %413 = vmatpush1.msra.mxu0 0.0
      %414 = vmatprep.subr.mxu0 0.0
      %415 = vmatpush1.msra.mxu0 0.0
      %416 = vmatprep.subr.mxu0 0.0
      %417 = vmatpush1.msra.mxu0 0.0
      %418 = vmatprep.subr.mxu0 0.0
      %419 = vmatpush1.msra.mxu0 0.0
      %420 = vmatprep.subr.mxu0 0.0
      %421 = vmatpush1.msra.mxu0 0.0
      %422 = vmatprep.subr.mxu0 0.0
      %423 = vmatpush1.msra.mxu0 0.0
      %424 = vmatprep.subr.mxu0 0.0
      %425 = vmatpush1.msra.mxu0 %v392
      %426 = vmatprep.subr.mxu0 0.0
      %427 = vmatpush2.msra.mxu0 0.0
      %428 = vmatprep.subr.mxu0 0.0
      %429 = vmatpush2.msra.mxu0 0.0
      %430 = vmatprep.subr.mxu0 0.0
      %431 = vmatpush2.msra.mxu0 0.0
      %432 = vmatprep.subr.mxu0 0.0
      %433 = vmatpush2.msra.mxu0 0.0
      %434 = vmatprep.subr.mxu0 0.0
      %435 = vmatpush2.msra.mxu0 0.0
      %436 = vmatprep.subr.mxu0 0.0
      %437 = vmatpush2.msra.mxu0 0.0
      %438 = vmatprep.subr.mxu0 0.0
      %439 = vmatpush2.msra.mxu0 0.0
      %440 = vmatprep.subr.mxu0 0.0
      %441 = vmatpush2.msra.mxu0 0.0
      %442 = vmatprep.subr.mxu0 0.0
      %443 = vmatpush2.msra.mxu0 0.0
      %444 = vmatprep.subr.mxu0 0.0
      %445 = vmatpush2.msra.mxu0 0.0
      %446 = vmatprep.subr.mxu0 0.0
      %447 = vmatpush2.msra.mxu0 0.0
      %448 = vmatprep.subr.mxu0 0.0
      %449 = vmatpush2.msra.mxu0 0.0
      %450 = vmatprep.subr.mxu0 0.0
      %451 = vmatpush2.msra.mxu0 0.0
      %452 = vmatprep.subr.mxu0 0.0
      %453 = vmatpush2.msra.mxu0 0.0
      %454 = vmatprep.subr.mxu0 0.0
      %455 = vmatpush2.msra.mxu0 0.0
      %456 = vmatprep.subr.mxu0 0.0
      %457 = vmatpush2.msra.mxu0 0.0
      %458 = vmatprep.mubr.f32.mxu0 0.0
      %459 = vmatmul.mubr.f32.gmra.mxu0 %v386
      %v460 = vpop.f32.mrf.mxu0
      %v461 = vadd.f32 0.0, %v460
      %v462 = vpop.f32.mrf.mxu0
      %463 = vmatprep.mubr.f32.mxu0 0.0
      %464 = vmatmul.mubr.f32.gmra.mxu0 %v388
      %v465 = vpop.f32.mrf.mxu0
      %v466 = vadd.f32 0.0, %v465
      %v467 = vpop.f32.mrf.mxu0
      %468 = vdwg.mxu0
      %v469 = vsel %vm385, %v364, 0
      %v471 = vsel %vm385, %v365, 0
      %v474 = vsel %vm390, %v373, 0
      %476 = vmatprep.subr.mxu0 0.0
      %477 = vmatpush1.msra.mxu0 0.0
      %478 = vmatprep.subr.mxu0 0.0
      %479 = vmatpush1.msra.mxu0 0.0
      %480 = vmatprep.subr.mxu0 0.0
      %481 = vmatpush1.msra.mxu0 0.0
      %482 = vmatprep.subr.mxu0 0.0
      %483 = vmatpush1.msra.mxu0 0.0
      %484 = vmatprep.subr.mxu0 0.0
      %485 = vmatpush1.msra.mxu0 0.0
      %486 = vmatprep.subr.mxu0 0.0
      %487 = vmatpush1.msra.mxu0 0.0
      %488 = vmatprep.subr.mxu0 0.0
      %489 = vmatpush1.msra.mxu0 0.0
      %490 = vmatprep.subr.mxu0 0.0
      %491 = vmatpush1.msra.mxu0 0.0
      %492 = vmatprep.subr.mxu0 0.0
      %493 = vmatpush1.msra.mxu0 0.0
      %494 = vmatprep.subr.mxu0 0.0
      %495 = vmatpush1.msra.mxu0 0.0
      %496 = vmatprep.subr.mxu0 0.0
      %497 = vmatpush1.msra.mxu0 0.0
      %498 = vmatprep.subr.mxu0 0.0
      %499 = vmatpush1.msra.mxu0 0.0
      %500 = vmatprep.subr.mxu0 0.0
      %501 = vmatpush1.msra.mxu0 0.0
      %502 = vmatprep.subr.mxu0 0.0
      %503 = vmatpush1.msra.mxu0 0.0
      %504 = vmatprep.subr.mxu0 0.0
      %505 = vmatpush1.msra.mxu0 0.0
      %506 = vmatprep.subr.mxu0 0.0
      %507 = vmatpush1.msra.mxu0 %v474
      %508 = vmatprep.subr.mxu0 0.0
      %509 = vmatpush2.msra.mxu0 0.0
      %510 = vmatprep.subr.mxu0 0.0
      %511 = vmatpush2.msra.mxu0 0.0
      %512 = vmatprep.subr.mxu0 0.0
      %513 = vmatpush2.msra.mxu0 0.0
      %514 = vmatprep.subr.mxu0 0.0
      %515 = vmatpush2.msra.mxu0 0.0
      %516 = vmatprep.subr.mxu0 0.0
      %517 = vmatpush2.msra.mxu0 0.0
      %518 = vmatprep.subr.mxu0 0.0
      %519 = vmatpush2.msra.mxu0 0.0
      %520 = vmatprep.subr.mxu0 0.0
      %521 = vmatpush2.msra.mxu0 0.0
      %522 = vmatprep.subr.mxu0 0.0
      %523 = vmatpush2.msra.mxu0 0.0
      %524 = vmatprep.subr.mxu0 0.0
      %525 = vmatpush2.msra.mxu0 0.0
      %526 = vmatprep.subr.mxu0 0.0
      %527 = vmatpush2.msra.mxu0 0.0
      %528 = vmatprep.subr.mxu0 0.0
      %529 = vmatpush2.msra.mxu0 0.0
      %530 = vmatprep.subr.mxu0 0.0
      %531 = vmatpush2.msra.mxu0 0.0
      %532 = vmatprep.subr.mxu0 0.0
      %533 = vmatpush2.msra.mxu0 0.0
      %534 = vmatprep.subr.mxu0 0.0
      %535 = vmatpush2.msra.mxu0 0.0
      %536 = vmatprep.subr.mxu0 0.0
      %537 = vmatpush2.msra.mxu0 0.0
      %538 = vmatprep.subr.mxu0 0.0
      %539 = vmatpush2.msra.mxu0 0.0
      %540 = vmatprep.mubr.f32.mxu0 0.0
      %541 = vmatmul.mubr.f32.gmra.mxu0 %v469
      %v542 = vpop.f32.mrf.mxu0
      %v543 = vadd.f32 %v461, %v542
      %v544 = vpop.f32.mrf.mxu0
      %545 = vmatprep.mubr.f32.mxu0 0.0
      %546 = vmatmul.mubr.f32.gmra.mxu0 %v471
      %v547 = vpop.f32.mrf.mxu0
      %v548 = vadd.f32 %v466, %v547
      %v549 = vpop.f32.mrf.mxu0
      %550 = vdwg.mxu0
      %s551 = scalar_lea.vmem %s3, 8
      %v552 = vld [vmem:[%s551] sm:$0xf]
      %vm553 = vcmask 1045504
      %v554 = vrot.slane %v364, 2
      %v555 = vrot.slane %v365, 2
      %v556 = vsel %vm553, %v554, %v555
      %v557 = vrot.slane %v366, 2
      %v558 = vsel %vm553, %v555, %v557
      %v559 = vsel %vm385, %v556, 0
      %v561 = vsel %vm385, %v558, 0
      %v564 = vsel %vm390, %v552, 0
      %566 = vmatprep.subr.mxu0 0.0
      %567 = vmatpush1.msra.mxu0 0.0
      %568 = vmatprep.subr.mxu0 0.0
      %569 = vmatpush1.msra.mxu0 0.0
      %570 = vmatprep.subr.mxu0 0.0
      %571 = vmatpush1.msra.mxu0 0.0
      %572 = vmatprep.subr.mxu0 0.0
      %573 = vmatpush1.msra.mxu0 0.0
      %574 = vmatprep.subr.mxu0 0.0
      %575 = vmatpush1.msra.mxu0 0.0
      %576 = vmatprep.subr.mxu0 0.0
      %577 = vmatpush1.msra.mxu0 0.0
      %578 = vmatprep.subr.mxu0 0.0
      %579 = vmatpush1.msra.mxu0 0.0
      %580 = vmatprep.subr.mxu0 0.0
      %581 = vmatpush1.msra.mxu0 0.0
      %582 = vmatprep.subr.mxu0 0.0
      %583 = vmatpush1.msra.mxu0 0.0
      %584 = vmatprep.subr.mxu0 0.0
      %585 = vmatpush1.msra.mxu0 0.0
      %586 = vmatprep.subr.mxu0 0.0
      %587 = vmatpush1.msra.mxu0 0.0
      %588 = vmatprep.subr.mxu0 0.0
      %589 = vmatpush1.msra.mxu0 0.0
      %590 = vmatprep.subr.mxu0 0.0
      %591 = vmatpush1.msra.mxu0 0.0
      %592 = vmatprep.subr.mxu0 0.0
      %593 = vmatpush1.msra.mxu0 0.0
      %594 = vmatprep.subr.mxu0 0.0
      %595 = vmatpush1.msra.mxu0 0.0
      %596 = vmatprep.subr.mxu0 0.0
      %597 = vmatpush1.msra.mxu0 %v564
      %598 = vmatprep.subr.mxu0 0.0
      %599 = vmatpush2.msra.mxu0 0.0
      %600 = vmatprep.subr.mxu0 0.0
      %601 = vmatpush2.msra.mxu0 0.0
      %602 = vmatprep.subr.mxu0 0.0
      %603 = vmatpush2.msra.mxu0 0.0
      %604 = vmatprep.subr.mxu0 0.0
      %605 = vmatpush2.msra.mxu0 0.0
      %606 = vmatprep.subr.mxu0 0.0
      %607 = vmatpush2.msra.mxu0 0.0
      %608 = vmatprep.subr.mxu0 0.0
      %609 = vmatpush2.msra.mxu0 0.0
      %610 = vmatprep.subr.mxu0 0.0
      %611 = vmatpush2.msra.mxu0 0.0
      %612 = vmatprep.subr.mxu0 0.0
      %613 = vmatpush2.msra.mxu0 0.0
      %614 = vmatprep.subr.mxu0 0.0
      %615 = vmatpush2.msra.mxu0 0.0
      %616 = vmatprep.subr.mxu0 0.0
      %617 = vmatpush2.msra.mxu0 0.0
      %618 = vmatprep.subr.mxu0 0.0
      %619 = vmatpush2.msra.mxu0 0.0
      %620 = vmatprep.subr.mxu0 0.0
      %621 = vmatpush2.msra.mxu0 0.0
      %622 = vmatprep.subr.mxu0 0.0
      %623 = vmatpush2.msra.mxu0 0.0
      %624 = vmatprep.subr.mxu0 0.0
      %625 = vmatpush2.msra.mxu0 0.0
      %626 = vmatprep.subr.mxu0 0.0
      %627 = vmatpush2.msra.mxu0 0.0
      %628 = vmatprep.subr.mxu0 0.0
      %629 = vmatpush2.msra.mxu0 0.0
      %630 = vmatprep.mubr.f32.mxu0 0.0
      %631 = vmatmul.mubr.f32.gmra.mxu0 %v559
      %v632 = vpop.f32.mrf.mxu0
      %v633 = vadd.f32 0.0, %v632
      %v634 = vpop.f32.mrf.mxu0
      %635 = vmatprep.mubr.f32.mxu0 0.0
      %636 = vmatmul.mubr.f32.gmra.mxu0 %v561
      %v637 = vpop.f32.mrf.mxu0
      %v638 = vadd.f32 0.0, %v637
      %v639 = vpop.f32.mrf.mxu0
      %640 = vdwg.mxu0
      %v641 = vadd.f32 %v543, %v633
      %v642 = vadd.f32 %v548, %v638
      %s643 = scalar_lea.vmem %s3, 12
      %v644 = vld [vmem:[%s643] sm:$0xf]
      %v646 = vsel %vm385, %v367, 0
      %v649 = vsel %vm385, %v368, 0
      %v652 = vsel %vm390, %v644, 0
      %654 = vmatprep.subr.mxu0 0.0
      %655 = vmatpush1.msra.mxu0 0.0
      %656 = vmatprep.subr.mxu0 0.0
      %657 = vmatpush1.msra.mxu0 0.0
      %658 = vmatprep.subr.mxu0 0.0
      %659 = vmatpush1.msra.mxu0 0.0
      %660 = vmatprep.subr.mxu0 0.0
      %661 = vmatpush1.msra.mxu0 0.0
      %662 = vmatprep.subr.mxu0 0.0
      %663 = vmatpush1.msra.mxu0 0.0
      %664 = vmatprep.subr.mxu0 0.0
      %665 = vmatpush1.msra.mxu0 0.0
      %666 = vmatprep.subr.mxu0 0.0
      %667 = vmatpush1.msra.mxu0 0.0
      %668 = vmatprep.subr.mxu0 0.0
      %669 = vmatpush1.msra.mxu0 0.0
      %670 = vmatprep.subr.mxu0 0.0
      %671 = vmatpush1.msra.mxu0 0.0
      %672 = vmatprep.subr.mxu0 0.0
      %673 = vmatpush1.msra.mxu0 0.0
      %674 = vmatprep.subr.mxu0 0.0
      %675 = vmatpush1.msra.mxu0 0.0
      %676 = vmatprep.subr.mxu0 0.0
      %677 = vmatpush1.msra.mxu0 0.0
      %678 = vmatprep.subr.mxu0 0.0
      %679 = vmatpush1.msra.mxu0 0.0
      %680 = vmatprep.subr.mxu0 0.0
      %681 = vmatpush1.msra.mxu0 0.0
      %682 = vmatprep.subr.mxu0 0.0
      %683 = vmatpush1.msra.mxu0 0.0
      %684 = vmatprep.subr.mxu0 0.0
      %685 = vmatpush1.msra.mxu0 %v652
      %686 = vmatprep.subr.mxu0 0.0
      %687 = vmatpush2.msra.mxu0 0.0
      %688 = vmatprep.subr.mxu0 0.0
      %689 = vmatpush2.msra.mxu0 0.0
      %690 = vmatprep.subr.mxu0 0.0
      %691 = vmatpush2.msra.mxu0 0.0
      %692 = vmatprep.subr.mxu0 0.0
      %693 = vmatpush2.msra.mxu0 0.0
      %694 = vmatprep.subr.mxu0 0.0
      %695 = vmatpush2.msra.mxu0 0.0
      %696 = vmatprep.subr.mxu0 0.0
      %697 = vmatpush2.msra.mxu0 0.0
      %698 = vmatprep.subr.mxu0 0.0
      %699 = vmatpush2.msra.mxu0 0.0
      %700 = vmatprep.subr.mxu0 0.0
      %701 = vmatpush2.msra.mxu0 0.0
      %702 = vmatprep.subr.mxu0 0.0
      %703 = vmatpush2.msra.mxu0 0.0
      %704 = vmatprep.subr.mxu0 0.0
      %705 = vmatpush2.msra.mxu0 0.0
      %706 = vmatprep.subr.mxu0 0.0
      %707 = vmatpush2.msra.mxu0 0.0
      %708 = vmatprep.subr.mxu0 0.0
      %709 = vmatpush2.msra.mxu0 0.0
      %710 = vmatprep.subr.mxu0 0.0
      %711 = vmatpush2.msra.mxu0 0.0
      %712 = vmatprep.subr.mxu0 0.0
      %713 = vmatpush2.msra.mxu0 0.0
      %714 = vmatprep.subr.mxu0 0.0
      %715 = vmatpush2.msra.mxu0 0.0
      %716 = vmatprep.subr.mxu0 0.0
      %717 = vmatpush2.msra.mxu0 0.0
      %718 = vmatprep.mubr.f32.mxu0 0.0
      %719 = vmatmul.mubr.f32.gmra.mxu0 %v646
      %v720 = vpop.f32.mrf.mxu0
      %v721 = vadd.f32 0.0, %v720
      %v722 = vpop.f32.mrf.mxu0
      %723 = vmatprep.mubr.f32.mxu0 0.0
      %724 = vmatmul.mubr.f32.gmra.mxu0 %v649
      %v725 = vpop.f32.mrf.mxu0
      %v726 = vadd.f32 0.0, %v725
      %v727 = vpop.f32.mrf.mxu0
      %728 = vdwg.mxu0
      %v729 = vadd.f32 %v641, %v721
      %v730 = vadd.f32 %v642, %v726
      %s731 = scalar_lea.vmem %s3, 16
      %v732 = vld [vmem:[%s731] sm:$0xf]
      %v734 = vrot.slane %v367, 1
      %v735 = vrot.slane %v368, 1
      %v736 = vsel %vm379, %v734, %v735
      %v737 = vrot.slane %v369, 1
      %v738 = vsel %vm379, %v735, %v737
      %v739 = vsel %vm385, %v736, 0
      %v741 = vsel %vm385, %v738, 0
      %v744 = vsel %vm390, %v732, 0
      %746 = vmatprep.subr.mxu0 0.0
      %747 = vmatpush1.msra.mxu0 0.0
      %748 = vmatprep.subr.mxu0 0.0
      %749 = vmatpush1.msra.mxu0 0.0
      %750 = vmatprep.subr.mxu0 0.0
      %751 = vmatpush1.msra.mxu0 0.0
      %752 = vmatprep.subr.mxu0 0.0
      %753 = vmatpush1.msra.mxu0 0.0
      %754 = vmatprep.subr.mxu0 0.0
      %755 = vmatpush1.msra.mxu0 0.0
      %756 = vmatprep.subr.mxu0 0.0
      %757 = vmatpush1.msra.mxu0 0.0
      %758 = vmatprep.subr.mxu0 0.0
      %759 = vmatpush1.msra.mxu0 0.0
      %760 = vmatprep.subr.mxu0 0.0
      %761 = vmatpush1.msra.mxu0 0.0
      %762 = vmatprep.subr.mxu0 0.0
      %763 = vmatpush1.msra.mxu0 0.0
      %764 = vmatprep.subr.mxu0 0.0
      %765 = vmatpush1.msra.mxu0 0.0
      %766 = vmatprep.subr.mxu0 0.0
      %767 = vmatpush1.msra.mxu0 0.0
      %768 = vmatprep.subr.mxu0 0.0
      %769 = vmatpush1.msra.mxu0 0.0
      %770 = vmatprep.subr.mxu0 0.0
      %771 = vmatpush1.msra.mxu0 0.0
      %772 = vmatprep.subr.mxu0 0.0
      %773 = vmatpush1.msra.mxu0 0.0
      %774 = vmatprep.subr.mxu0 0.0
      %775 = vmatpush1.msra.mxu0 0.0
      %776 = vmatprep.subr.mxu0 0.0
      %777 = vmatpush1.msra.mxu0 %v744
      %778 = vmatprep.subr.mxu0 0.0
      %779 = vmatpush2.msra.mxu0 0.0
      %780 = vmatprep.subr.mxu0 0.0
      %781 = vmatpush2.msra.mxu0 0.0
      %782 = vmatprep.subr.mxu0 0.0
      %783 = vmatpush2.msra.mxu0 0.0
      %784 = vmatprep.subr.mxu0 0.0
      %785 = vmatpush2.msra.mxu0 0.0
      %786 = vmatprep.subr.mxu0 0.0
      %787 = vmatpush2.msra.mxu0 0.0
      %788 = vmatprep.subr.mxu0 0.0
      %789 = vmatpush2.msra.mxu0 0.0
      %790 = vmatprep.subr.mxu0 0.0
      %791 = vmatpush2.msra.mxu0 0.0
      %792 = vmatprep.subr.mxu0 0.0
      %793 = vmatpush2.msra.mxu0 0.0
      %794 = vmatprep.subr.mxu0 0.0
      %795 = vmatpush2.msra.mxu0 0.0
      %796 = vmatprep.subr.mxu0 0.0
      %797 = vmatpush2.msra.mxu0 0.0
      %798 = vmatprep.subr.mxu0 0.0
      %799 = vmatpush2.msra.mxu0 0.0
      %800 = vmatprep.subr.mxu0 0.0
      %801 = vmatpush2.msra.mxu0 0.0
      %802 = vmatprep.subr.mxu0 0.0
      %803 = vmatpush2.msra.mxu0 0.0
      %804 = vmatprep.subr.mxu0 0.0
      %805 = vmatpush2.msra.mxu0 0.0
      %806 = vmatprep.subr.mxu0 0.0
      %807 = vmatpush2.msra.mxu0 0.0
      %808 = vmatprep.subr.mxu0 0.0
      %809 = vmatpush2.msra.mxu0 0.0
      %810 = vmatprep.mubr.f32.mxu0 0.0
      %811 = vmatmul.mubr.f32.gmra.mxu0 %v739
      %v812 = vpop.f32.mrf.mxu0
      %v813 = vadd.f32 0.0, %v812
      %v814 = vpop.f32.mrf.mxu0
      %815 = vmatprep.mubr.f32.mxu0 0.0
      %816 = vmatmul.mubr.f32.gmra.mxu0 %v741
      %v817 = vpop.f32.mrf.mxu0
      %v818 = vadd.f32 0.0, %v817
      %v819 = vpop.f32.mrf.mxu0
      %820 = vdwg.mxu0
      %v821 = vadd.f32 %v729, %v813
      %v822 = vadd.f32 %v730, %v818
      %s823 = scalar_lea.vmem %s3, 20
      %v824 = vld [vmem:[%s823] sm:$0xf]
      %v825 = vrot.slane %v367, 2
      %v826 = vrot.slane %v368, 2
      %v827 = vsel %vm553, %v825, %v826
      %v828 = vrot.slane %v369, 2
      %v829 = vsel %vm553, %v826, %v828
      %v830 = vsel %vm385, %v827, 0
      %v832 = vsel %vm385, %v829, 0
      %v835 = vsel %vm390, %v824, 0
      %837 = vmatprep.subr.mxu0 0.0
      %838 = vmatpush1.msra.mxu0 0.0
      %839 = vmatprep.subr.mxu0 0.0
      %840 = vmatpush1.msra.mxu0 0.0
      %841 = vmatprep.subr.mxu0 0.0
      %842 = vmatpush1.msra.mxu0 0.0
      %843 = vmatprep.subr.mxu0 0.0
      %844 = vmatpush1.msra.mxu0 0.0
      %845 = vmatprep.subr.mxu0 0.0
      %846 = vmatpush1.msra.mxu0 0.0
      %847 = vmatprep.subr.mxu0 0.0
      %848 = vmatpush1.msra.mxu0 0.0
      %849 = vmatprep.subr.mxu0 0.0
      %850 = vmatpush1.msra.mxu0 0.0
      %851 = vmatprep.subr.mxu0 0.0
      %852 = vmatpush1.msra.mxu0 0.0
      %853 = vmatprep.subr.mxu0 0.0
      %854 = vmatpush1.msra.mxu0 0.0
      %855 = vmatprep.subr.mxu0 0.0
      %856 = vmatpush1.msra.mxu0 0.0
      %857 = vmatprep.subr.mxu0 0.0
      %858 = vmatpush1.msra.mxu0 0.0
      %859 = vmatprep.subr.mxu0 0.0
      %860 = vmatpush1.msra.mxu0 0.0
      %861 = vmatprep.subr.mxu0 0.0
      %862 = vmatpush1.msra.mxu0 0.0
      %863 = vmatprep.subr.mxu0 0.0
      %864 = vmatpush1.msra.mxu0 0.0
      %865 = vmatprep.subr.mxu0 0.0
      %866 = vmatpush1.msra.mxu0 0.0
      %867 = vmatprep.subr.mxu0 0.0
      %868 = vmatpush1.msra.mxu0 %v835
      %869 = vmatprep.subr.mxu0 0.0
      %870 = vmatpush2.msra.mxu0 0.0
      %871 = vmatprep.subr.mxu0 0.0
      %872 = vmatpush2.msra.mxu0 0.0
      %873 = vmatprep.subr.mxu0 0.0
      %874 = vmatpush2.msra.mxu0 0.0
      %875 = vmatprep.subr.mxu0 0.0
      %876 = vmatpush2.msra.mxu0 0.0
      %877 = vmatprep.subr.mxu0 0.0
      %878 = vmatpush2.msra.mxu0 0.0
      %879 = vmatprep.subr.mxu0 0.0
      %880 = vmatpush2.msra.mxu0 0.0
      %881 = vmatprep.subr.mxu0 0.0
      %882 = vmatpush2.msra.mxu0 0.0
      %883 = vmatprep.subr.mxu0 0.0
      %884 = vmatpush2.msra.mxu0 0.0
      %885 = vmatprep.subr.mxu0 0.0
      %886 = vmatpush2.msra.mxu0 0.0
      %887 = vmatprep.subr.mxu0 0.0
      %888 = vmatpush2.msra.mxu0 0.0
      %889 = vmatprep.subr.mxu0 0.0
      %890 = vmatpush2.msra.mxu0 0.0
      %891 = vmatprep.subr.mxu0 0.0
      %892 = vmatpush2.msra.mxu0 0.0
      %893 = vmatprep.subr.mxu0 0.0
      %894 = vmatpush2.msra.mxu0 0.0
      %895 = vmatprep.subr.mxu0 0.0
      %896 = vmatpush2.msra.mxu0 0.0
      %897 = vmatprep.subr.mxu0 0.0
      %898 = vmatpush2.msra.mxu0 0.0
      %899 = vmatprep.subr.mxu0 0.0
      %900 = vmatpush2.msra.mxu0 0.0
      %901 = vmatprep.mubr.f32.mxu0 0.0
      %902 = vmatmul.mubr.f32.gmra.mxu0 %v830
      %v903 = vpop.f32.mrf.mxu0
      %v904 = vadd.f32 0.0, %v903
      %v905 = vpop.f32.mrf.mxu0
      %906 = vmatprep.mubr.f32.mxu0 0.0
      %907 = vmatmul.mubr.f32.gmra.mxu0 %v832
      %v908 = vpop.f32.mrf.mxu0
      %v909 = vadd.f32 0.0, %v908
      %v910 = vpop.f32.mrf.mxu0
      %911 = vdwg.mxu0
      %v912 = vadd.f32 %v821, %v904
      %v913 = vadd.f32 %v822, %v909
      %s914 = scalar_lea.vmem %s3, 24
      %v915 = vld [vmem:[%s914] sm:$0xf]
      %v917 = vsel %vm385, %v370, 0
      %v920 = vsel %vm385, %v371, 0
      %v923 = vsel %vm390, %v915, 0
      %925 = vmatprep.subr.mxu0 0.0
      %926 = vmatpush1.msra.mxu0 0.0
      %927 = vmatprep.subr.mxu0 0.0
      %928 = vmatpush1.msra.mxu0 0.0
      %929 = vmatprep.subr.mxu0 0.0
      %930 = vmatpush1.msra.mxu0 0.0
      %931 = vmatprep.subr.mxu0 0.0
      %932 = vmatpush1.msra.mxu0 0.0
      %933 = vmatprep.subr.mxu0 0.0
      %934 = vmatpush1.msra.mxu0 0.0
      %935 = vmatprep.subr.mxu0 0.0
      %936 = vmatpush1.msra.mxu0 0.0
      %937 = vmatprep.subr.mxu0 0.0
      %938 = vmatpush1.msra.mxu0 0.0
      %939 = vmatprep.subr.mxu0 0.0
      %940 = vmatpush1.msra.mxu0 0.0
      %941 = vmatprep.subr.mxu0 0.0
      %942 = vmatpush1.msra.mxu0 0.0
      %943 = vmatprep.subr.mxu0 0.0
      %944 = vmatpush1.msra.mxu0 0.0
      %945 = vmatprep.subr.mxu0 0.0
      %946 = vmatpush1.msra.mxu0 0.0
      %947 = vmatprep.subr.mxu0 0.0
      %948 = vmatpush1.msra.mxu0 0.0
      %949 = vmatprep.subr.mxu0 0.0
      %950 = vmatpush1.msra.mxu0 0.0
      %951 = vmatprep.subr.mxu0 0.0
      %952 = vmatpush1.msra.mxu0 0.0
      %953 = vmatprep.subr.mxu0 0.0
      %954 = vmatpush1.msra.mxu0 0.0
      %955 = vmatprep.subr.mxu0 0.0
      %956 = vmatpush1.msra.mxu0 %v923
      %957 = vmatprep.subr.mxu0 0.0
      %958 = vmatpush2.msra.mxu0 0.0
      %959 = vmatprep.subr.mxu0 0.0
      %960 = vmatpush2.msra.mxu0 0.0
      %961 = vmatprep.subr.mxu0 0.0
      %962 = vmatpush2.msra.mxu0 0.0
      %963 = vmatprep.subr.mxu0 0.0
      %964 = vmatpush2.msra.mxu0 0.0
      %965 = vmatprep.subr.mxu0 0.0
      %966 = vmatpush2.msra.mxu0 0.0
      %967 = vmatprep.subr.mxu0 0.0
      %968 = vmatpush2.msra.mxu0 0.0
      %969 = vmatprep.subr.mxu0 0.0
      %970 = vmatpush2.msra.mxu0 0.0
      %971 = vmatprep.subr.mxu0 0.0
      %972 = vmatpush2.msra.mxu0 0.0
      %973 = vmatprep.subr.mxu0 0.0
      %974 = vmatpush2.msra.mxu0 0.0
      %975 = vmatprep.subr.mxu0 0.0
      %976 = vmatpush2.msra.mxu0 0.0
      %977 = vmatprep.subr.mxu0 0.0
      %978 = vmatpush2.msra.mxu0 0.0
      %979 = vmatprep.subr.mxu0 0.0
      %980 = vmatpush2.msra.mxu0 0.0
      %981 = vmatprep.subr.mxu0 0.0
      %982 = vmatpush2.msra.mxu0 0.0
      %983 = vmatprep.subr.mxu0 0.0
      %984 = vmatpush2.msra.mxu0 0.0
      %985 = vmatprep.subr.mxu0 0.0
      %986 = vmatpush2.msra.mxu0 0.0
      %987 = vmatprep.subr.mxu0 0.0
      %988 = vmatpush2.msra.mxu0 0.0
      %989 = vmatprep.mubr.f32.mxu0 0.0
      %990 = vmatmul.mubr.f32.gmra.mxu0 %v917
      %v991 = vpop.f32.mrf.mxu0
      %v992 = vadd.f32 0.0, %v991
      %v993 = vpop.f32.mrf.mxu0
      %994 = vmatprep.mubr.f32.mxu0 0.0
      %995 = vmatmul.mubr.f32.gmra.mxu0 %v920
      %v996 = vpop.f32.mrf.mxu0
      %v997 = vadd.f32 0.0, %v996
      %v998 = vpop.f32.mrf.mxu0
      %999 = vdwg.mxu0
      %v1000 = vadd.f32 %v912, %v992
      %v1001 = vadd.f32 %v913, %v997
      %s1002 = scalar_lea.vmem %s3, 28
      %v1003 = vld [vmem:[%s1002] sm:$0xf]
      %v1005 = vrot.slane %v370, 1
      %v1006 = vrot.slane %v371, 1
      %v1007 = vsel %vm379, %v1005, %v1006
      %v1008 = vrot.slane %v372, 1
      %v1009 = vsel %vm379, %v1006, %v1008
      %v1010 = vsel %vm385, %v1007, 0
      %v1012 = vsel %vm385, %v1009, 0
      %v1015 = vsel %vm390, %v1003, 0
      %1017 = vmatprep.subr.mxu0 0.0
      %1018 = vmatpush1.msra.mxu0 0.0
      %1019 = vmatprep.subr.mxu0 0.0
      %1020 = vmatpush1.msra.mxu0 0.0
      %1021 = vmatprep.subr.mxu0 0.0
      %1022 = vmatpush1.msra.mxu0 0.0
      %1023 = vmatprep.subr.mxu0 0.0
      %1024 = vmatpush1.msra.mxu0 0.0
      %1025 = vmatprep.subr.mxu0 0.0
      %1026 = vmatpush1.msra.mxu0 0.0
      %1027 = vmatprep.subr.mxu0 0.0
      %1028 = vmatpush1.msra.mxu0 0.0
      %1029 = vmatprep.subr.mxu0 0.0
      %1030 = vmatpush1.msra.mxu0 0.0
      %1031 = vmatprep.subr.mxu0 0.0
      %1032 = vmatpush1.msra.mxu0 0.0
      %1033 = vmatprep.subr.mxu0 0.0
      %1034 = vmatpush1.msra.mxu0 0.0
      %1035 = vmatprep.subr.mxu0 0.0
      %1036 = vmatpush1.msra.mxu0 0.0
      %1037 = vmatprep.subr.mxu0 0.0
      %1038 = vmatpush1.msra.mxu0 0.0
      %1039 = vmatprep.subr.mxu0 0.0
      %1040 = vmatpush1.msra.mxu0 0.0
      %1041 = vmatprep.subr.mxu0 0.0
      %1042 = vmatpush1.msra.mxu0 0.0
      %1043 = vmatprep.subr.mxu0 0.0
      %1044 = vmatpush1.msra.mxu0 0.0
      %1045 = vmatprep.subr.mxu0 0.0
      %1046 = vmatpush1.msra.mxu0 0.0
      %1047 = vmatprep.subr.mxu0 0.0
      %1048 = vmatpush1.msra.mxu0 %v1015
      %1049 = vmatprep.subr.mxu0 0.0
      %1050 = vmatpush2.msra.mxu0 0.0
      %1051 = vmatprep.subr.mxu0 0.0
      %1052 = vmatpush2.msra.mxu0 0.0
      %1053 = vmatprep.subr.mxu0 0.0
      %1054 = vmatpush2.msra.mxu0 0.0
      %1055 = vmatprep.subr.mxu0 0.0
      %1056 = vmatpush2.msra.mxu0 0.0
      %1057 = vmatprep.subr.mxu0 0.0
      %1058 = vmatpush2.msra.mxu0 0.0
      %1059 = vmatprep.subr.mxu0 0.0
      %1060 = vmatpush2.msra.mxu0 0.0
      %1061 = vmatprep.subr.mxu0 0.0
      %1062 = vmatpush2.msra.mxu0 0.0
      %1063 = vmatprep.subr.mxu0 0.0
      %1064 = vmatpush2.msra.mxu0 0.0
      %1065 = vmatprep.subr.mxu0 0.0
      %1066 = vmatpush2.msra.mxu0 0.0
      %1067 = vmatprep.subr.mxu0 0.0
      %1068 = vmatpush2.msra.mxu0 0.0
      %1069 = vmatprep.subr.mxu0 0.0
      %1070 = vmatpush2.msra.mxu0 0.0
      %1071 = vmatprep.subr.mxu0 0.0
      %1072 = vmatpush2.msra.mxu0 0.0
      %1073 = vmatprep.subr.mxu0 0.0
      %1074 = vmatpush2.msra.mxu0 0.0
      %1075 = vmatprep.subr.mxu0 0.0
      %1076 = vmatpush2.msra.mxu0 0.0
      %1077 = vmatprep.subr.mxu0 0.0
      %1078 = vmatpush2.msra.mxu0 0.0
      %1079 = vmatprep.subr.mxu0 0.0
      %1080 = vmatpush2.msra.mxu0 0.0
      %1081 = vmatprep.mubr.f32.mxu0 0.0
      %1082 = vmatmul.mubr.f32.gmra.mxu0 %v1010
      %v1083 = vpop.f32.mrf.mxu0
      %v1084 = vadd.f32 0.0, %v1083
      %v1085 = vpop.f32.mrf.mxu0
      %1086 = vmatprep.mubr.f32.mxu0 0.0
      %1087 = vmatmul.mubr.f32.gmra.mxu0 %v1012
      %v1088 = vpop.f32.mrf.mxu0
      %v1089 = vadd.f32 0.0, %v1088
      %v1090 = vpop.f32.mrf.mxu0
      %1091 = vdwg.mxu0
      %v1092 = vadd.f32 %v1000, %v1084
      %v1093 = vadd.f32 %v1001, %v1089
      %s1094 = scalar_lea.vmem %s3, 32
      %v1095 = vld [vmem:[%s1094] sm:$0xf]
      %v1096 = vrot.slane %v370, 2
      %v1097 = vrot.slane %v371, 2
      %v1098 = vsel %vm553, %v1096, %v1097
      %v1099 = vrot.slane %v372, 2
      %v1100 = vsel %vm553, %v1097, %v1099
      %v1101 = vsel %vm385, %v1098, 0
      %v1103 = vsel %vm385, %v1100, 0
      %v1106 = vsel %vm390, %v1095, 0
      %1108 = vmatprep.subr.mxu0 0.0
      %1109 = vmatpush1.msra.mxu0 0.0
      %1110 = vmatprep.subr.mxu0 0.0
      %1111 = vmatpush1.msra.mxu0 0.0
      %1112 = vmatprep.subr.mxu0 0.0
      %1113 = vmatpush1.msra.mxu0 0.0
      %1114 = vmatprep.subr.mxu0 0.0
      %1115 = vmatpush1.msra.mxu0 0.0
      %1116 = vmatprep.subr.mxu0 0.0
      %1117 = vmatpush1.msra.mxu0 0.0
      %1118 = vmatprep.subr.mxu0 0.0
      %1119 = vmatpush1.msra.mxu0 0.0
      %1120 = vmatprep.subr.mxu0 0.0
      %1121 = vmatpush1.msra.mxu0 0.0
      %1122 = vmatprep.subr.mxu0 0.0
      %1123 = vmatpush1.msra.mxu0 0.0
      %1124 = vmatprep.subr.mxu0 0.0
      %1125 = vmatpush1.msra.mxu0 0.0
      %1126 = vmatprep.subr.mxu0 0.0
      %1127 = vmatpush1.msra.mxu0 0.0
      %1128 = vmatprep.subr.mxu0 0.0
      %1129 = vmatpush1.msra.mxu0 0.0
      %1130 = vmatprep.subr.mxu0 0.0
      %1131 = vmatpush1.msra.mxu0 0.0
      %1132 = vmatprep.subr.mxu0 0.0
      %1133 = vmatpush1.msra.mxu0 0.0
      %1134 = vmatprep.subr.mxu0 0.0
      %1135 = vmatpush1.msra.mxu0 0.0
      %1136 = vmatprep.subr.mxu0 0.0
      %1137 = vmatpush1.msra.mxu0 0.0
      %1138 = vmatprep.subr.mxu0 0.0
      %1139 = vmatpush1.msra.mxu0 %v1106
      %1140 = vmatprep.subr.mxu0 0.0
      %1141 = vmatpush2.msra.mxu0 0.0
      %1142 = vmatprep.subr.mxu0 0.0
      %1143 = vmatpush2.msra.mxu0 0.0
      %1144 = vmatprep.subr.mxu0 0.0
      %1145 = vmatpush2.msra.mxu0 0.0
      %1146 = vmatprep.subr.mxu0 0.0
      %1147 = vmatpush2.msra.mxu0 0.0
      %1148 = vmatprep.subr.mxu0 0.0
      %1149 = vmatpush2.msra.mxu0 0.0
      %1150 = vmatprep.subr.mxu0 0.0
      %1151 = vmatpush2.msra.mxu0 0.0
      %1152 = vmatprep.subr.mxu0 0.0
      %1153 = vmatpush2.msra.mxu0 0.0
      %1154 = vmatprep.subr.mxu0 0.0
      %1155 = vmatpush2.msra.mxu0 0.0
      %1156 = vmatprep.subr.mxu0 0.0
      %1157 = vmatpush2.msra.mxu0 0.0
      %1158 = vmatprep.subr.mxu0 0.0
      %1159 = vmatpush2.msra.mxu0 0.0
      %1160 = vmatprep.subr.mxu0 0.0
      %1161 = vmatpush2.msra.mxu0 0.0
      %1162 = vmatprep.subr.mxu0 0.0
      %1163 = vmatpush2.msra.mxu0 0.0
      %1164 = vmatprep.subr.mxu0 0.0
      %1165 = vmatpush2.msra.mxu0 0.0
      %1166 = vmatprep.subr.mxu0 0.0
      %1167 = vmatpush2.msra.mxu0 0.0
      %1168 = vmatprep.subr.mxu0 0.0
      %1169 = vmatpush2.msra.mxu0 0.0
      %1170 = vmatprep.subr.mxu0 0.0
      %1171 = vmatpush2.msra.mxu0 0.0
      %1172 = vmatprep.mubr.f32.mxu0 0.0
      %1173 = vmatmul.mubr.f32.gmra.mxu0 %v1101
      %v1174 = vpop.f32.mrf.mxu0
      %v1175 = vadd.f32 0.0, %v1174
      %v1176 = vpop.f32.mrf.mxu0
      %1177 = vmatprep.mubr.f32.mxu0 0.0
      %1178 = vmatmul.mubr.f32.gmra.mxu0 %v1103
      %v1179 = vpop.f32.mrf.mxu0
      %v1180 = vadd.f32 0.0, %v1179
      %v1181 = vpop.f32.mrf.mxu0
      %1182 = vdwg.mxu0
      %v1183 = vadd.f32 %v1092, %v1175
      %v1184 = vadd.f32 %v1093, %v1180
      %1185 = vst [vmem:[%s355] sm:$0xff] %v1183
      %1186 = vst [vmem:[%s355 + $0x8] sm:$0xff] %v1184
      %v1187 = vadd.f32 %v1183, %v1184
      %v1188 = vrot.slane %v1187, 4
      %v1189 = vadd.f32 %v1187, %v1188
      %v1190 = vrot.slane %v1189, 2
      %v1191 = vadd.f32 %v1189, %v1190
      %v1192 = vrot.slane %v1191, 1
      %v1193 = vadd.f32 %v1191, %v1192
      %v1194 = vmul.f32 %v1183, %v1183
      %v1195 = vmul.f32 %v1184, %v1184
      %v1196 = vadd.f32 %v1194, %v1195
      %v1197 = vrot.slane %v1196, 4
      %v1198 = vadd.f32 %v1196, %v1197
      %v1199 = vrot.slane %v1198, 2
      %v1200 = vadd.f32 %v1198, %v1199
      %v1201 = vrot.slane %v1200, 1
      %v1202 = vadd.f32 %v1200, %v1201
      %vm1203 = vcmask 1040384
      %v1204 = vsel %vm1203, %v1193, %v1202
      %1205 = vst [vmem:[%s363] sm:$0x3] %v1204
      %p1206 = scmp.lt.s32.totalorder %s21, 1
      %s1207 = scalar_select %p1206, %s21, 1
      %p1208 = scmp.lt.s32.totalorder %s22, 15
      %s1209 = scalar_select %p1208, %s22, 15
      %s1210 = smul.addr %s1209, 2
      %s1211 = smul.addr %s1207, 32
      %s1212 = sadd.s32 %s1210, %s1211
      %s1213 = smul.addr %s1212, 8
      %s1214 = scalar_lea.vmem %s4, %s1213
      %p1215 = scmp.lt.s32.totalorder %s21, 1
      %s1216 = scalar_select %p1215, %s21, 1
      %p1217 = scmp.lt.s32.totalorder %s22, 15
      %s1218 = scalar_select %p1217, %s22, 15
      %s1219 = smul.addr %s1216, 16
      %s1220 = sadd.s32 %s1218, %s1219
      %s1221 = smul.addr %s1220, 2
      %s1222 = scalar_lea.vmem %s5, %s1221
      // Predicated region
      $region37: #{conv_batch_norm.2} parent=35 // pred_check
        %p1223 = pneg %p158
      $region38: #{conv_batch_norm.2} parent=35 // pred_check_branch
        %1225 = sbr.rel (%p1223) target = $region40
      $region39: #{conv_batch_norm.2} parent=35 // pred_region
        _
      $region40: #{conv_batch_norm.2} parent=35 // pred_fallthru
        _
      // Predicated region
      $region41: #{conv_batch_norm.2} parent=35 // pred_check
        %p1226 = pneg %p186
      $region42: #{conv_batch_norm.2} parent=35 // pred_check_branch
        %1228 = sbr.rel (%p1226) target = $region44
      $region43: #{conv_batch_norm.2} parent=35 // pred_region
        _
      $region44: #{conv_batch_norm.2} parent=35 // pred_fallthru
        _
    $region36: #{conv_batch_norm.2} parent=5 // pred_fallthru
      _
    %p1229 = scmp.le.s32.totalorder 2, %s12
    // Predicated region
    $region45: #{conv_batch_norm.2} parent=5 // pred_check
      %p1230 = pneg %p1229
    $region46: #{conv_batch_norm.2} parent=5 // pred_check_branch
      %1232 = sbr.rel (%p1230) target = $region48
    $region47: #{conv_batch_norm.2} parent=5 // pred_region
      %s1233 = ssub.s32 %s12, 2
      // Predicated region
      $region49: #{conv_batch_norm.2} parent=47 // pred_check
        %p1234 = pneg %p164
      $region50: #{conv_batch_norm.2} parent=47 // pred_check_branch
        %1236 = sbr.rel (%p1234) target = $region52
      $region51: #{conv_batch_norm.2} parent=47 // pred_region
        %p1237 = scmp.lt.s32.totalorder %s23, 1
        %s1238 = scalar_select %p1237, %s23, 1
        %p1239 = scmp.lt.s32.totalorder %s24, 15
        %s1240 = scalar_select %p1239, %s24, 15
        %s1241 = smul.addr %s1240, 2
        %s1242 = smul.addr %s1238, 32
        %s1243 = sadd.s32 %s1241, %s1242
        %s1244 = smul.addr %s1243, 8
        %s1245 = scalar_lea.vmem %s4, %s1244
      $region52: #{conv_batch_norm.2} parent=47 // pred_fallthru
        _
      // Predicated region
      $region53: #{conv_batch_norm.2} parent=47 // pred_check
        %p1246 = pneg %p192
      $region54: #{conv_batch_norm.2} parent=47 // pred_check_branch
        %1248 = sbr.rel (%p1246) target = $region56
      $region55: #{conv_batch_norm.2} parent=47 // pred_region
        %p1249 = scmp.lt.s32.totalorder %s23, 1
        %s1250 = scalar_select %p1249, %s23, 1
        %p1251 = scmp.lt.s32.totalorder %s24, 15
        %s1252 = scalar_select %p1251, %s24, 15
        %s1253 = smul.addr %s1250, 16
        %s1254 = sadd.s32 %s1252, %s1253
        %s1255 = smul.addr %s1254, 2
        %s1256 = scalar_lea.vmem %s5, %s1255
      $region56: #{conv_batch_norm.2} parent=47 // pred_fallthru
        _
    $region48: #{conv_batch_norm.2} parent=5 // pred_fallthru
      _
  $region6: #{conv_batch_norm.2} parent=0 // loop_footer
    %s16 = sadd.s32 1, %s12
  $region7: #{conv_batch_norm.2} parent=0 // loop_footer_branch
    %11 = sbr.rel target = $region3
  $region8: #{conv_batch_norm.2} parent=0 // loop_exit
    _

</llo_original>
